<compile_context>
chip_gen: v7x
topology: tpu7x:2x2x1
jax: 0.10.0
libtpu: 0.0.40
codegen_flags: <defaults>
</compile_context>

<pallas_src>
import functools

import jax
import jax.numpy as jnp
import numpy as np
from jax import lax
from jax.experimental import pallas as pl
from jax.experimental.pallas import tpu as pltpu


def _attention_kernel(x_ref, wqkv_ref, bqkv_ref, wo_ref, bo_ref, o_ref,
                      *, n_heads, d_k, scale, bt, kv_tile):
    """One grid step == `bt` batch elements.

    x_ref    : (bt, C, S)            input tokens, channel-major (f32)
    wqkv_ref : (3, n_heads, d_k, C)  per-{q,k,v}, per-head projection weights (bf16)
    bqkv_ref : (3, n_heads, 1, d_k)  projection biases (f32)
    wo_ref   : (n_heads, C, d_k)     per-head output weights (bf16)
    bo_ref   : (C, 1)                output bias (f32)
    o_ref    : (bt, C, S)            output tokens, channel-major (f32)
    """
    f32 = jnp.float32
    bf16 = jnp.bfloat16

    seq = x_ref.shape[2]
    n_jt = (seq + kv_tile - 1) // kv_tile        # static key-axis tile count

    # Hoist all (tiny) weight/bias loads out of the batch/head loops so the
    # values are materialized once and stay VMEM/vreg-resident.
    wqkv = wqkv_ref[...]                         # (3, nh, d_k, C)  bf16
    bqkv = bqkv_ref[...]                         # (3, nh, 1, d_k)  f32
    wo = wo_ref[...]                             # (nh, C, d_k)     bf16
    bo = bo_ref[...]                             # (C, 1)           f32

    for b in range(bt):
        x_cs = x_ref[b]                          # (C, S) f32, residual source
        # One small in-VMEM transpose so every matmul contracts a trailing dim
        # (keeps every dot_general in plain / rhs-transposed MXU form).
        x_sc = jnp.transpose(x_cs, (1, 0)).astype(bf16)     # (S, C) bf16

        out_acc = jnp.zeros(x_cs.shape, dtype=f32)          # (C, S) accumulator

        for h in range(n_heads):
            def _proj(t):
                # rhs-transposed MXU form: (S, C) x (d_k, C)^T -> (S, d_k)
                r = lax.dot_general(x_sc, wqkv[t, h], (((1,), (1,)), ((), ())),
                                    preferred_element_type=f32)
                return r + bqkv[t, h]            # + (1, d_k) bias, f32

            q_bf = (_proj(0) * scale).astype(bf16)           # (S, d_k)
            k_bf = _proj(1).astype(bf16)                     # cast once per head
            v_bf = _proj(2).astype(bf16)

            res = jnp.zeros((seq, d_k), dtype=f32)           # (S_i, d_k)
            for jt in range(n_jt):
                j0 = jt * kv_tile
                tj = min(kv_tile, seq - j0)
                k_t = k_bf[j0:j0 + tj, :]                    # (tj, d_k)
                v_t = v_bf[j0:j0 + tj, :]                    # (tj, d_k)

                s_t = lax.dot_general(q_bf, k_t, (((1,), (1,)), ((), ())),
                                      preferred_element_type=f32)  # (S_i, tj)

                # softmax over the *query* axis i (axis 0), as in the reference;
                # each (full-S_i, tj) tile is self-contained, so no online pass.
                m = jnp.max(s_t, axis=0, keepdims=True)
                e = jnp.exp(s_t - m)
                attn = e * pl.reciprocal(jnp.sum(e, axis=0, keepdims=True),
                                         approx=True)

                res = res + lax.dot_general(attn.astype(bf16), v_t,
                                            (((1,), (0,)), ((), ())),
                                            preferred_element_type=f32)

            # Per-head contribution of the output projection, accumulated on a
            # single lane-dense (C, S) buffer (no concat, no narrow slices).
            out_acc = out_acc + lax.dot_general(
                wo[h], res.astype(bf16), (((1,), (1,)), ((), ())),
                preferred_element_type=f32)                  # (C, S)

        o_ref[b] = (out_acc + bo + x_cs).astype(o_ref.dtype)  # residual add


def attention_block(x_nchw, params, *, n_heads, d_k, kv_tile=512):
    """x_nchw: (B, C, H, W) float32. Returns (B, C, H, W)."""
    B, C, H, W = x_nchw.shape
    S = H * W
    scale = float(d_k) ** -0.5
    f32 = jnp.float32
    bf16 = jnp.bfloat16

    # NCHW -> (B, C, S) is a pure reshape: no transpose glue, no extra HBM pass.
    x_seq = x_nchw.reshape(B, C, S).astype(f32)

    # Pre-split the fused projection into per-{q,k,v}, per-head weight blocks
    # (one-time, tiny) so the kernel never slices the qkv feature axis.
    wqkv = (params["proj_w"].reshape(n_heads, 3, d_k, C)
            .transpose(1, 0, 2, 3).astype(bf16))                 # (3, nh, d_k, C)
    bqkv = (params["proj_b"].reshape(n_heads, 3, d_k)
            .transpose(1, 0, 2).reshape(3, n_heads, 1, d_k)
            .astype(f32))                                        # (3, nh, 1, d_k)
    wo = (params["out_w"].reshape(C, n_heads, d_k)
          .transpose(1, 0, 2).astype(bf16))                      # (nh, C, d_k)
    bo = params["out_b"].reshape(C, 1).astype(f32)               # (C, 1)

    # Fold as many batch elements as reasonable into one grid step (amortizes
    # per-step overhead; weights are fetched once per step anyway). The 2 MiB
    # cap keeps 2 blocks x 2 pipeline buffers comfortably inside the default
    # scoped-VMEM limit even on v5e (16 MiB).
    bt = 1
    for cand in range(B, 0, -1):
        if B % cand == 0 and cand * C * S * 4 <= (2 << 20):
            bt = cand
            break

    kv_tile = min(kv_tile, S)
    # TODO(synk): at production S (e.g. 64x64 -> S=4096) set an explicit
    #             vmem_limit_bytes per generation; at these test shapes the
    #             default scoped VMEM limit is far more than enough.

    kernel = functools.partial(
        _attention_kernel, n_heads=n_heads, d_k=d_k, scale=scale,
        bt=bt, kv_tile=kv_tile)

    out_seq = pl.pallas_call(
        kernel,
        out_shape=jax.ShapeDtypeStruct((B, C, S), f32),
        grid_spec=pltpu.PrefetchScalarGridSpec(
            num_scalar_prefetch=0,
            grid=(B // bt,),
            in_specs=[
                pl.BlockSpec((bt, C, S), lambda i: (i, 0, 0)),
                pl.BlockSpec(wqkv.shape, lambda i: (0, 0, 0, 0)),
                pl.BlockSpec(bqkv.shape, lambda i: (0, 0, 0, 0)),
                pl.BlockSpec(wo.shape, lambda i: (0, 0, 0)),
                pl.BlockSpec(bo.shape, lambda i: (0, 0)),
            ],
            out_specs=pl.BlockSpec((bt, C, S), lambda i: (i, 0, 0)),
        ),
        compiler_params=pltpu.CompilerParams(
            dimension_semantics=("parallel",),
        ),
    )(x_seq, wqkv, bqkv, wo, bo)

    # (B, C, S) -> NCHW is again a free reshape.
    return out_seq.reshape(B, C, H, W)


def reference_attention_block(x_nchw, params, *, n_heads, d_k):
    """Pure-JAX reference mirroring the PyTorch forward exactly."""
    B, C, H, W = x_nchw.shape
    scale = float(d_k) ** -0.5
    x = jnp.transpose(x_nchw.reshape(B, C, -1), (0, 2, 1))            # (B, S, C)
    qkv = x @ params["proj_w"].T + params["proj_b"]                   # (B, S, 3*nh*dk)
    qkv = qkv.reshape(B, -1, n_heads, 3 * d_k)
    q, k, v = jnp.split(qkv, 3, axis=-1)
    attn = jnp.einsum("bihd,bjhd->bijh", q, k) * scale
    attn = jax.nn.softmax(attn, axis=1)                               # softmax over i!
    res = jnp.einsum("bijh,bjhd->bihd", attn, v)
    res = res.reshape(B, -1, n_heads * d_k)
    res = res @ params["out_w"].T + params["out_b"]
    res = res + x
    return jnp.transpose(res, (0, 2, 1)).reshape(B, C, H, W)


if __name__ == "__main__":
    # small, module-consistent shapes
    B, C, H, W = 2, 16, 8, 8
    n_heads, d_k = 2, 8
    # TODO(synk): self.norm (GroupNorm) is never applied in the PyTorch forward,
    #             so its parameters are intentionally not materialized here.

    key = jax.random.PRNGKey(0)
    kx, kpw, kpb, kow, kob = jax.random.split(key, 5)

    x = jax.random.normal(kx, (B, C, H, W), dtype=jnp.float32)
    params = {
        "proj_w": jax.random.normal(kpw, (n_heads * d_k * 3, C), jnp.float32) * 0.1,
        "proj_b": jax.random.normal(kpb, (n_heads * d_k * 3,), jnp.float32) * 0.1,
        "out_w": jax.random.normal(kow, (C, n_heads * d_k), jnp.float32) * 0.1,
        "out_b": jax.random.normal(kob, (C,), jnp.float32) * 0.1,
    }

    out = attention_block(x, params, n_heads=n_heads, d_k=d_k)
    out = jax.block_until_ready(out)

    ref = jax.block_until_ready(
        reference_attention_block(x, params, n_heads=n_heads, d_k=d_k)
    )
    # bf16 MXU operands (f32 accumulation) stay well within this tolerance.
    np.testing.assert_allclose(np.asarray(out), np.asarray(ref), rtol=5e-3, atol=5e-3)

    print("KERNEL_OK")
</pallas_src>

<mosaic_0001>
module attributes {stable_mosaic.version = 11 : i64} {
  func.func @_attention_kernel(%arg0: i32, %arg1: memref<2x16x64xf32, #tpu.memory_space<vmem>>, %arg2: memref<3x2x8x16xbf16, #tpu.memory_space<vmem>>, %arg3: memref<3x2x1x8xf32, #tpu.memory_space<vmem>>, %arg4: memref<2x16x8xbf16, #tpu.memory_space<vmem>>, %arg5: memref<16x1xf32, #tpu.memory_space<vmem>>, %arg6: memref<2x16x64xf32, #tpu.memory_space<vmem>>) attributes {dimension_semantics = [#tpu.dimension_semantics<parallel>], iteration_bounds = array<i64: 1>, scalar_prefetch = 0 : i64, scratch_operands = 0 : i64, tpu.core_type = #tpu.core_type<tc>, window_params = [{transform_indices = @transform_0, window_bounds = array<i64: 2, 16, 64>}, {pipeline_mode = #tpu.pipeline_mode<synchronous>, transform_indices = @transform_1, window_bounds = array<i64: 3, 2, 8, 16>}, {pipeline_mode = #tpu.pipeline_mode<synchronous>, transform_indices = @transform_2, window_bounds = array<i64: 3, 2, 1, 8>}, {pipeline_mode = #tpu.pipeline_mode<synchronous>, transform_indices = @transform_3, window_bounds = array<i64: 2, 16, 8>}, {pipeline_mode = #tpu.pipeline_mode<synchronous>, transform_indices = @transform_4, window_bounds = array<i64: 16, 1>}, {transform_indices = @transform_5, window_bounds = array<i64: 2, 16, 64>}]} {
    %c0 = arith.constant 0 : index
    %c0_0 = arith.constant 0 : index
    %c0_1 = arith.constant 0 : index
    %c0_2 = arith.constant 0 : index
    %0 = vector.load %arg2[%c0, %c0_0, %c0_1, %c0_2] : memref<3x2x8x16xbf16, #tpu.memory_space<vmem>>, vector<3x2x8x16xbf16>
    %c0_3 = arith.constant 0 : index
    %c0_4 = arith.constant 0 : index
    %c0_5 = arith.constant 0 : index
    %c0_6 = arith.constant 0 : index
    %1 = vector.load %arg3[%c0_3, %c0_4, %c0_5, %c0_6] : memref<3x2x1x8xf32, #tpu.memory_space<vmem>>, vector<3x2x1x8xf32>
    %c0_7 = arith.constant 0 : index
    %c0_8 = arith.constant 0 : index
    %c0_9 = arith.constant 0 : index
    %2 = vector.load %arg4[%c0_7, %c0_8, %c0_9] : memref<2x16x8xbf16, #tpu.memory_space<vmem>>, vector<2x16x8xbf16>
    %c0_10 = arith.constant 0 : index
    %c0_11 = arith.constant 0 : index
    %3 = vector.load %arg5[%c0_10, %c0_11] : memref<16x1xf32, #tpu.memory_space<vmem>>, vector<16x1xf32>
    %c0_12 = arith.constant 0 : index
    %c0_13 = arith.constant 0 : index
    %c0_14 = arith.constant 0 : index
    %4 = vector.load %arg1[%c0_12, %c0_13, %c0_14] : memref<2x16x64xf32, #tpu.memory_space<vmem>>, vector<1x16x64xf32>
    %5 = vector.shape_cast %4 : vector<1x16x64xf32> to vector<16x64xf32>
    %6 = tpu.transpose %5, [1, 0] : vector<16x64xf32> -> vector<64x16xf32>
    %7 = arith.truncf %6 : vector<64x16xf32> to vector<64x16xbf16>
    %cst = arith.constant 0.000000e+00 : f32
    %8 = vector.broadcast %cst : f32 to vector<16x64xf32>
    %9 = vector.extract_strided_slice %0 {offsets = [0, 0, 0, 0], sizes = [1, 1, 8, 16], strides = [1, 1, 1, 1]} : vector<3x2x8x16xbf16> to vector<1x1x8x16xbf16>
    %10 = vector.shape_cast %9 : vector<1x1x8x16xbf16> to vector<8x16xbf16>
    %cst_15 = arith.constant dense<0.000000e+00> : vector<64x8xf32>
    %11 = tpu.matmul %7, %10, %cst_15 {dimension_numbers = #tpu.dot_dimension_numbers<[1], [1], [0], [0], [0, 0, 1, 0], [], []>} : vector<64x16xbf16>, vector<8x16xbf16>, vector<64x8xf32> -> vector<64x8xf32>
    %12 = vector.extract_strided_slice %1 {offsets = [0, 0, 0, 0], sizes = [1, 1, 1, 8], strides = [1, 1, 1, 1]} : vector<3x2x1x8xf32> to vector<1x1x1x8xf32>
    %13 = vector.shape_cast %12 : vector<1x1x1x8xf32> to vector<1x8xf32>
    %14 = vector.broadcast %13 : vector<1x8xf32> to vector<64x8xf32>
    %15 = arith.addf %11, %14 : vector<64x8xf32>
    %cst_16 = arith.constant 0.353553385 : f32
    %16 = vector.broadcast %cst_16 : f32 to vector<64x8xf32>
    %17 = arith.mulf %15, %16 : vector<64x8xf32>
    %18 = arith.truncf %17 : vector<64x8xf32> to vector<64x8xbf16>
    %19 = vector.extract_strided_slice %0 {offsets = [1, 0, 0, 0], sizes = [1, 1, 8, 16], strides = [1, 1, 1, 1]} : vector<3x2x8x16xbf16> to vector<1x1x8x16xbf16>
    %20 = vector.shape_cast %19 : vector<1x1x8x16xbf16> to vector<8x16xbf16>
    %cst_17 = arith.constant dense<0.000000e+00> : vector<64x8xf32>
    %21 = tpu.matmul %7, %20, %cst_17 {dimension_numbers = #tpu.dot_dimension_numbers<[1], [1], [0], [0], [0, 0, 1, 0], [], []>} : vector<64x16xbf16>, vector<8x16xbf16>, vector<64x8xf32> -> vector<64x8xf32>
    %22 = vector.extract_strided_slice %1 {offsets = [1, 0, 0, 0], sizes = [1, 1, 1, 8], strides = [1, 1, 1, 1]} : vector<3x2x1x8xf32> to vector<1x1x1x8xf32>
    %23 = vector.shape_cast %22 : vector<1x1x1x8xf32> to vector<1x8xf32>
    %24 = vector.broadcast %23 : vector<1x8xf32> to vector<64x8xf32>
    %25 = arith.addf %21, %24 : vector<64x8xf32>
    %26 = arith.truncf %25 : vector<64x8xf32> to vector<64x8xbf16>
    %27 = vector.extract_strided_slice %0 {offsets = [2, 0, 0, 0], sizes = [1, 1, 8, 16], strides = [1, 1, 1, 1]} : vector<3x2x8x16xbf16> to vector<1x1x8x16xbf16>
    %28 = vector.shape_cast %27 : vector<1x1x8x16xbf16> to vector<8x16xbf16>
    %cst_18 = arith.constant dense<0.000000e+00> : vector<64x8xf32>
    %29 = tpu.matmul %7, %28, %cst_18 {dimension_numbers = #tpu.dot_dimension_numbers<[1], [1], [0], [0], [0, 0, 1, 0], [], []>} : vector<64x16xbf16>, vector<8x16xbf16>, vector<64x8xf32> -> vector<64x8xf32>
    %30 = vector.extract_strided_slice %1 {offsets = [2, 0, 0, 0], sizes = [1, 1, 1, 8], strides = [1, 1, 1, 1]} : vector<3x2x1x8xf32> to vector<1x1x1x8xf32>
    %31 = vector.shape_cast %30 : vector<1x1x1x8xf32> to vector<1x8xf32>
    %32 = vector.broadcast %31 : vector<1x8xf32> to vector<64x8xf32>
    %33 = arith.addf %29, %32 : vector<64x8xf32>
    %34 = arith.truncf %33 : vector<64x8xf32> to vector<64x8xbf16>
    %cst_19 = arith.constant 0.000000e+00 : f32
    %35 = vector.broadcast %cst_19 : f32 to vector<64x8xf32>
    %cst_20 = arith.constant dense<0.000000e+00> : vector<64x64xf32>
    %36 = tpu.matmul %18, %26, %cst_20 {dimension_numbers = #tpu.dot_dimension_numbers<[1], [1], [0], [0], [0, 0, 1, 0], [], []>} : vector<64x8xbf16>, vector<64x8xbf16>, vector<64x64xf32> -> vector<64x64xf32>
    %cst_21 = arith.constant dense<0xFF800000> : vector<64xf32>
    %37 = vector.multi_reduction <maximumf>, %36, %cst_21 [0] : vector<64x64xf32> to vector<64xf32>
    %38 = vector.shape_cast %37 : vector<64xf32> to vector<1x64xf32>
    %39 = vector.broadcast %38 : vector<1x64xf32> to vector<64x64xf32>
    %40 = arith.subf %36, %39 : vector<64x64xf32>
    %41 = math.exp %40 : vector<64x64xf32>
    %cst_22 = arith.constant dense<0.000000e+00> : vector<64xf32>
    %42 = vector.multi_reduction <add>, %41, %cst_22 [0] : vector<64x64xf32> to vector<64xf32>
    %43 = vector.shape_cast %42 : vector<64xf32> to vector<1x64xf32>
    %44 = tpu.reciprocal %43 {approx = true} : vector<1x64xf32> -> vector<1x64xf32>
    %45 = vector.broadcast %44 : vector<1x64xf32> to vector<64x64xf32>
    %46 = arith.mulf %41, %45 : vector<64x64xf32>
    %47 = arith.truncf %46 : vector<64x64xf32> to vector<64x64xbf16>
    %cst_23 = arith.constant dense<0.000000e+00> : vector<64x8xf32>
    %48 = tpu.matmul %47, %34, %cst_23 {dimension_numbers = #tpu.dot_dimension_numbers<[1], [0], [0], [1], [0, 0, 1, 1], [], []>} : vector<64x64xbf16>, vector<64x8xbf16>, vector<64x8xf32> -> vector<64x8xf32>
    %49 = arith.addf %35, %48 : vector<64x8xf32>
    %50 = vector.extract_strided_slice %2 {offsets = [0, 0, 0], sizes = [1, 16, 8], strides = [1, 1, 1]} : vector<2x16x8xbf16> to vector<1x16x8xbf16>
    %51 = vector.shape_cast %50 : vector<1x16x8xbf16> to vector<16x8xbf16>
    %52 = arith.truncf %49 : vector<64x8xf32> to vector<64x8xbf16>
    %cst_24 = arith.constant dense<0.000000e+00> : vector<16x64xf32>
    %53 = tpu.matmul %51, %52, %cst_24 {dimension_numbers = #tpu.dot_dimension_numbers<[1], [1], [0], [0], [0, 0, 1, 0], [], []>} : vector<16x8xbf16>, vector<64x8xbf16>, vector<16x64xf32> -> vector<16x64xf32>
    %54 = arith.addf %8, %53 : vector<16x64xf32>
    %55 = vector.extract_strided_slice %0 {offsets = [0, 1, 0, 0], sizes = [1, 1, 8, 16], strides = [1, 1, 1, 1]} : vector<3x2x8x16xbf16> to vector<1x1x8x16xbf16>
    %56 = vector.shape_cast %55 : vector<1x1x8x16xbf16> to vector<8x16xbf16>
    %cst_25 = arith.constant dense<0.000000e+00> : vector<64x8xf32>
    %57 = tpu.matmul %7, %56, %cst_25 {dimension_numbers = #tpu.dot_dimension_numbers<[1], [1], [0], [0], [0, 0, 1, 0], [], []>} : vector<64x16xbf16>, vector<8x16xbf16>, vector<64x8xf32> -> vector<64x8xf32>
    %58 = vector.extract_strided_slice %1 {offsets = [0, 1, 0, 0], sizes = [1, 1, 1, 8], strides = [1, 1, 1, 1]} : vector<3x2x1x8xf32> to vector<1x1x1x8xf32>
    %59 = vector.shape_cast %58 : vector<1x1x1x8xf32> to vector<1x8xf32>
    %60 = vector.broadcast %59 : vector<1x8xf32> to vector<64x8xf32>
    %61 = arith.addf %57, %60 : vector<64x8xf32>
    %cst_26 = arith.constant 0.353553385 : f32
    %62 = vector.broadcast %cst_26 : f32 to vector<64x8xf32>
    %63 = arith.mulf %61, %62 : vector<64x8xf32>
    %64 = arith.truncf %63 : vector<64x8xf32> to vector<64x8xbf16>
    %65 = vector.extract_strided_slice %0 {offsets = [1, 1, 0, 0], sizes = [1, 1, 8, 16], strides = [1, 1, 1, 1]} : vector<3x2x8x16xbf16> to vector<1x1x8x16xbf16>
    %66 = vector.shape_cast %65 : vector<1x1x8x16xbf16> to vector<8x16xbf16>
    %cst_27 = arith.constant dense<0.000000e+00> : vector<64x8xf32>
    %67 = tpu.matmul %7, %66, %cst_27 {dimension_numbers = #tpu.dot_dimension_numbers<[1], [1], [0], [0], [0, 0, 1, 0], [], []>} : vector<64x16xbf16>, vector<8x16xbf16>, vector<64x8xf32> -> vector<64x8xf32>
    %68 = vector.extract_strided_slice %1 {offsets = [1, 1, 0, 0], sizes = [1, 1, 1, 8], strides = [1, 1, 1, 1]} : vector<3x2x1x8xf32> to vector<1x1x1x8xf32>
    %69 = vector.shape_cast %68 : vector<1x1x1x8xf32> to vector<1x8xf32>
    %70 = vector.broadcast %69 : vector<1x8xf32> to vector<64x8xf32>
    %71 = arith.addf %67, %70 : vector<64x8xf32>
    %72 = arith.truncf %71 : vector<64x8xf32> to vector<64x8xbf16>
    %73 = vector.extract_strided_slice %0 {offsets = [2, 1, 0, 0], sizes = [1, 1, 8, 16], strides = [1, 1, 1, 1]} : vector<3x2x8x16xbf16> to vector<1x1x8x16xbf16>
    %74 = vector.shape_cast %73 : vector<1x1x8x16xbf16> to vector<8x16xbf16>
    %cst_28 = arith.constant dense<0.000000e+00> : vector<64x8xf32>
    %75 = tpu.matmul %7, %74, %cst_28 {dimension_numbers = #tpu.dot_dimension_numbers<[1], [1], [0], [0], [0, 0, 1, 0], [], []>} : vector<64x16xbf16>, vector<8x16xbf16>, vector<64x8xf32> -> vector<64x8xf32>
    %76 = vector.extract_strided_slice %1 {offsets = [2, 1, 0, 0], sizes = [1, 1, 1, 8], strides = [1, 1, 1, 1]} : vector<3x2x1x8xf32> to vector<1x1x1x8xf32>
    %77 = vector.shape_cast %76 : vector<1x1x1x8xf32> to vector<1x8xf32>
    %78 = vector.broadcast %77 : vector<1x8xf32> to vector<64x8xf32>
    %79 = arith.addf %75, %78 : vector<64x8xf32>
    %80 = arith.truncf %79 : vector<64x8xf32> to vector<64x8xbf16>
    %cst_29 = arith.constant 0.000000e+00 : f32
    %81 = vector.broadcast %cst_29 : f32 to vector<64x8xf32>
    %cst_30 = arith.constant dense<0.000000e+00> : vector<64x64xf32>
    %82 = tpu.matmul %64, %72, %cst_30 {dimension_numbers = #tpu.dot_dimension_numbers<[1], [1], [0], [0], [0, 0, 1, 0], [], []>} : vector<64x8xbf16>, vector<64x8xbf16>, vector<64x64xf32> -> vector<64x64xf32>
    %cst_31 = arith.constant dense<0xFF800000> : vector<64xf32>
    %83 = vector.multi_reduction <maximumf>, %82, %cst_31 [0] : vector<64x64xf32> to vector<64xf32>
    %84 = vector.shape_cast %83 : vector<64xf32> to vector<1x64xf32>
    %85 = vector.broadcast %84 : vector<1x64xf32> to vector<64x64xf32>
    %86 = arith.subf %82, %85 : vector<64x64xf32>
    %87 = math.exp %86 : vector<64x64xf32>
    %cst_32 = arith.constant dense<0.000000e+00> : vector<64xf32>
    %88 = vector.multi_reduction <add>, %87, %cst_32 [0] : vector<64x64xf32> to vector<64xf32>
    %89 = vector.shape_cast %88 : vector<64xf32> to vector<1x64xf32>
    %90 = tpu.reciprocal %89 {approx = true} : vector<1x64xf32> -> vector<1x64xf32>
    %91 = vector.broadcast %90 : vector<1x64xf32> to vector<64x64xf32>
    %92 = arith.mulf %87, %91 : vector<64x64xf32>
    %93 = arith.truncf %92 : vector<64x64xf32> to vector<64x64xbf16>
    %cst_33 = arith.constant dense<0.000000e+00> : vector<64x8xf32>
    %94 = tpu.matmul %93, %80, %cst_33 {dimension_numbers = #tpu.dot_dimension_numbers<[1], [0], [0], [1], [0, 0, 1, 1], [], []>} : vector<64x64xbf16>, vector<64x8xbf16>, vector<64x8xf32> -> vector<64x8xf32>
    %95 = arith.addf %81, %94 : vector<64x8xf32>
    %96 = vector.extract_strided_slice %2 {offsets = [1, 0, 0], sizes = [1, 16, 8], strides = [1, 1, 1]} : vector<2x16x8xbf16> to vector<1x16x8xbf16>
    %97 = vector.shape_cast %96 : vector<1x16x8xbf16> to vector<16x8xbf16>
    %98 = arith.truncf %95 : vector<64x8xf32> to vector<64x8xbf16>
    %cst_34 = arith.constant dense<0.000000e+00> : vector<16x64xf32>
    %99 = tpu.matmul %97, %98, %cst_34 {dimension_numbers = #tpu.dot_dimension_numbers<[1], [1], [0], [0], [0, 0, 1, 0], [], []>} : vector<16x8xbf16>, vector<64x8xbf16>, vector<16x64xf32> -> vector<16x64xf32>
    %100 = arith.addf %54, %99 : vector<16x64xf32>
    %101 = vector.broadcast %3 : vector<16x1xf32> to vector<16x64xf32>
    %102 = arith.addf %100, %101 : vector<16x64xf32>
    %103 = arith.addf %102, %5 : vector<16x64xf32>
    %c0_35 = arith.constant 0 : index
    %c0_36 = arith.constant 0 : index
    %c0_37 = arith.constant 0 : index
    %104 = vector.load %arg6[%c0_35, %c0_36, %c0_37] : memref<2x16x64xf32, #tpu.memory_space<vmem>>, vector<1x16x64xf32>
    %105 = vector.shape_cast %104 : vector<1x16x64xf32> to vector<16x64xf32>
    %106 = vector.shape_cast %103 : vector<16x64xf32> to vector<1x16x64xf32>
    tpu.vector_store %arg6[%c0_35, %c0_36, %c0_37], %106 {strides = array<i32>} : memref<2x16x64xf32, #tpu.memory_space<vmem>>, vector<1x16x64xf32>,
    %c1 = arith.constant 1 : index
    %c0_38 = arith.constant 0 : index
    %c0_39 = arith.constant 0 : index
    %107 = vector.load %arg1[%c1, %c0_38, %c0_39] : memref<2x16x64xf32, #tpu.memory_space<vmem>>, vector<1x16x64xf32>
    %108 = vector.shape_cast %107 : vector<1x16x64xf32> to vector<16x64xf32>
    %109 = tpu.transpose %108, [1, 0] : vector<16x64xf32> -> vector<64x16xf32>
    %110 = arith.truncf %109 : vector<64x16xf32> to vector<64x16xbf16>
    %cst_40 = arith.constant 0.000000e+00 : f32
    %111 = vector.broadcast %cst_40 : f32 to vector<16x64xf32>
    %112 = vector.extract_strided_slice %0 {offsets = [0, 0, 0, 0], sizes = [1, 1, 8, 16], strides = [1, 1, 1, 1]} : vector<3x2x8x16xbf16> to vector<1x1x8x16xbf16>
    %113 = vector.shape_cast %112 : vector<1x1x8x16xbf16> to vector<8x16xbf16>
    %cst_41 = arith.constant dense<0.000000e+00> : vector<64x8xf32>
    %114 = tpu.matmul %110, %113, %cst_41 {dimension_numbers = #tpu.dot_dimension_numbers<[1], [1], [0], [0], [0, 0, 1, 0], [], []>} : vector<64x16xbf16>, vector<8x16xbf16>, vector<64x8xf32> -> vector<64x8xf32>
    %115 = vector.extract_strided_slice %1 {offsets = [0, 0, 0, 0], sizes = [1, 1, 1, 8], strides = [1, 1, 1, 1]} : vector<3x2x1x8xf32> to vector<1x1x1x8xf32>
    %116 = vector.shape_cast %115 : vector<1x1x1x8xf32> to vector<1x8xf32>
    %117 = vector.broadcast %116 : vector<1x8xf32> to vector<64x8xf32>
    %118 = arith.addf %114, %117 : vector<64x8xf32>
    %cst_42 = arith.constant 0.353553385 : f32
    %119 = vector.broadcast %cst_42 : f32 to vector<64x8xf32>
    %120 = arith.mulf %118, %119 : vector<64x8xf32>
    %121 = arith.truncf %120 : vector<64x8xf32> to vector<64x8xbf16>
    %122 = vector.extract_strided_slice %0 {offsets = [1, 0, 0, 0], sizes = [1, 1, 8, 16], strides = [1, 1, 1, 1]} : vector<3x2x8x16xbf16> to vector<1x1x8x16xbf16>
    %123 = vector.shape_cast %122 : vector<1x1x8x16xbf16> to vector<8x16xbf16>
    %cst_43 = arith.constant dense<0.000000e+00> : vector<64x8xf32>
    %124 = tpu.matmul %110, %123, %cst_43 {dimension_numbers = #tpu.dot_dimension_numbers<[1], [1], [0], [0], [0, 0, 1, 0], [], []>} : vector<64x16xbf16>, vector<8x16xbf16>, vector<64x8xf32> -> vector<64x8xf32>
    %125 = vector.extract_strided_slice %1 {offsets = [1, 0, 0, 0], sizes = [1, 1, 1, 8], strides = [1, 1, 1, 1]} : vector<3x2x1x8xf32> to vector<1x1x1x8xf32>
    %126 = vector.shape_cast %125 : vector<1x1x1x8xf32> to vector<1x8xf32>
    %127 = vector.broadcast %126 : vector<1x8xf32> to vector<64x8xf32>
    %128 = arith.addf %124, %127 : vector<64x8xf32>
    %129 = arith.truncf %128 : vector<64x8xf32> to vector<64x8xbf16>
    %130 = vector.extract_strided_slice %0 {offsets = [2, 0, 0, 0], sizes = [1, 1, 8, 16], strides = [1, 1, 1, 1]} : vector<3x2x8x16xbf16> to vector<1x1x8x16xbf16>
    %131 = vector.shape_cast %130 : vector<1x1x8x16xbf16> to vector<8x16xbf16>
    %cst_44 = arith.constant dense<0.000000e+00> : vector<64x8xf32>
    %132 = tpu.matmul %110, %131, %cst_44 {dimension_numbers = #tpu.dot_dimension_numbers<[1], [1], [0], [0], [0, 0, 1, 0], [], []>} : vector<64x16xbf16>, vector<8x16xbf16>, vector<64x8xf32> -> vector<64x8xf32>
    %133 = vector.extract_strided_slice %1 {offsets = [2, 0, 0, 0], sizes = [1, 1, 1, 8], strides = [1, 1, 1, 1]} : vector<3x2x1x8xf32> to vector<1x1x1x8xf32>
    %134 = vector.shape_cast %133 : vector<1x1x1x8xf32> to vector<1x8xf32>
    %135 = vector.broadcast %134 : vector<1x8xf32> to vector<64x8xf32>
    %136 = arith.addf %132, %135 : vector<64x8xf32>
    %137 = arith.truncf %136 : vector<64x8xf32> to vector<64x8xbf16>
    %cst_45 = arith.constant 0.000000e+00 : f32
    %138 = vector.broadcast %cst_45 : f32 to vector<64x8xf32>
    %cst_46 = arith.constant dense<0.000000e+00> : vector<64x64xf32>
    %139 = tpu.matmul %121, %129, %cst_46 {dimension_numbers = #tpu.dot_dimension_numbers<[1], [1], [0], [0], [0, 0, 1, 0], [], []>} : vector<64x8xbf16>, vector<64x8xbf16>, vector<64x64xf32> -> vector<64x64xf32>
    %cst_47 = arith.constant dense<0xFF800000> : vector<64xf32>
    %140 = vector.multi_reduction <maximumf>, %139, %cst_47 [0] : vector<64x64xf32> to vector<64xf32>
    %141 = vector.shape_cast %140 : vector<64xf32> to vector<1x64xf32>
    %142 = vector.broadcast %141 : vector<1x64xf32> to vector<64x64xf32>
    %143 = arith.subf %139, %142 : vector<64x64xf32>
    %144 = math.exp %143 : vector<64x64xf32>
    %cst_48 = arith.constant dense<0.000000e+00> : vector<64xf32>
    %145 = vector.multi_reduction <add>, %144, %cst_48 [0] : vector<64x64xf32> to vector<64xf32>
    %146 = vector.shape_cast %145 : vector<64xf32> to vector<1x64xf32>
    %147 = tpu.reciprocal %146 {approx = true} : vector<1x64xf32> -> vector<1x64xf32>
    %148 = vector.broadcast %147 : vector<1x64xf32> to vector<64x64xf32>
    %149 = arith.mulf %144, %148 : vector<64x64xf32>
    %150 = arith.truncf %149 : vector<64x64xf32> to vector<64x64xbf16>
    %cst_49 = arith.constant dense<0.000000e+00> : vector<64x8xf32>
    %151 = tpu.matmul %150, %137, %cst_49 {dimension_numbers = #tpu.dot_dimension_numbers<[1], [0], [0], [1], [0, 0, 1, 1], [], []>} : vector<64x64xbf16>, vector<64x8xbf16>, vector<64x8xf32> -> vector<64x8xf32>
    %152 = arith.addf %138, %151 : vector<64x8xf32>
    %153 = vector.extract_strided_slice %2 {offsets = [0, 0, 0], sizes = [1, 16, 8], strides = [1, 1, 1]} : vector<2x16x8xbf16> to vector<1x16x8xbf16>
    %154 = vector.shape_cast %153 : vector<1x16x8xbf16> to vector<16x8xbf16>
    %155 = arith.truncf %152 : vector<64x8xf32> to vector<64x8xbf16>
    %cst_50 = arith.constant dense<0.000000e+00> : vector<16x64xf32>
    %156 = tpu.matmul %154, %155, %cst_50 {dimension_numbers = #tpu.dot_dimension_numbers<[1], [1], [0], [0], [0, 0, 1, 0], [], []>} : vector<16x8xbf16>, vector<64x8xbf16>, vector<16x64xf32> -> vector<16x64xf32>
    %157 = arith.addf %111, %156 : vector<16x64xf32>
    %158 = vector.extract_strided_slice %0 {offsets = [0, 1, 0, 0], sizes = [1, 1, 8, 16], strides = [1, 1, 1, 1]} : vector<3x2x8x16xbf16> to vector<1x1x8x16xbf16>
    %159 = vector.shape_cast %158 : vector<1x1x8x16xbf16> to vector<8x16xbf16>
    %cst_51 = arith.constant dense<0.000000e+00> : vector<64x8xf32>
    %160 = tpu.matmul %110, %159, %cst_51 {dimension_numbers = #tpu.dot_dimension_numbers<[1], [1], [0], [0], [0, 0, 1, 0], [], []>} : vector<64x16xbf16>, vector<8x16xbf16>, vector<64x8xf32> -> vector<64x8xf32>
    %161 = vector.extract_strided_slice %1 {offsets = [0, 1, 0, 0], sizes = [1, 1, 1, 8], strides = [1, 1, 1, 1]} : vector<3x2x1x8xf32> to vector<1x1x1x8xf32>
    %162 = vector.shape_cast %161 : vector<1x1x1x8xf32> to vector<1x8xf32>
    %163 = vector.broadcast %162 : vector<1x8xf32> to vector<64x8xf32>
    %164 = arith.addf %160, %163 : vector<64x8xf32>
    %cst_52 = arith.constant 0.353553385 : f32
    %165 = vector.broadcast %cst_52 : f32 to vector<64x8xf32>
    %166 = arith.mulf %164, %165 : vector<64x8xf32>
    %167 = arith.truncf %166 : vector<64x8xf32> to vector<64x8xbf16>
    %168 = vector.extract_strided_slice %0 {offsets = [1, 1, 0, 0], sizes = [1, 1, 8, 16], strides = [1, 1, 1, 1]} : vector<3x2x8x16xbf16> to vector<1x1x8x16xbf16>
    %169 = vector.shape_cast %168 : vector<1x1x8x16xbf16> to vector<8x16xbf16>
    %cst_53 = arith.constant dense<0.000000e+00> : vector<64x8xf32>
    %170 = tpu.matmul %110, %169, %cst_53 {dimension_numbers = #tpu.dot_dimension_numbers<[1], [1], [0], [0], [0, 0, 1, 0], [], []>} : vector<64x16xbf16>, vector<8x16xbf16>, vector<64x8xf32> -> vector<64x8xf32>
    %171 = vector.extract_strided_slice %1 {offsets = [1, 1, 0, 0], sizes = [1, 1, 1, 8], strides = [1, 1, 1, 1]} : vector<3x2x1x8xf32> to vector<1x1x1x8xf32>
    %172 = vector.shape_cast %171 : vector<1x1x1x8xf32> to vector<1x8xf32>
    %173 = vector.broadcast %172 : vector<1x8xf32> to vector<64x8xf32>
    %174 = arith.addf %170, %173 : vector<64x8xf32>
    %175 = arith.truncf %174 : vector<64x8xf32> to vector<64x8xbf16>
    %176 = vector.extract_strided_slice %0 {offsets = [2, 1, 0, 0], sizes = [1, 1, 8, 16], strides = [1, 1, 1, 1]} : vector<3x2x8x16xbf16> to vector<1x1x8x16xbf16>
    %177 = vector.shape_cast %176 : vector<1x1x8x16xbf16> to vector<8x16xbf16>
    %cst_54 = arith.constant dense<0.000000e+00> : vector<64x8xf32>
    %178 = tpu.matmul %110, %177, %cst_54 {dimension_numbers = #tpu.dot_dimension_numbers<[1], [1], [0], [0], [0, 0, 1, 0], [], []>} : vector<64x16xbf16>, vector<8x16xbf16>, vector<64x8xf32> -> vector<64x8xf32>
    %179 = vector.extract_strided_slice %1 {offsets = [2, 1, 0, 0], sizes = [1, 1, 1, 8], strides = [1, 1, 1, 1]} : vector<3x2x1x8xf32> to vector<1x1x1x8xf32>
    %180 = vector.shape_cast %179 : vector<1x1x1x8xf32> to vector<1x8xf32>
    %181 = vector.broadcast %180 : vector<1x8xf32> to vector<64x8xf32>
    %182 = arith.addf %178, %181 : vector<64x8xf32>
    %183 = arith.truncf %182 : vector<64x8xf32> to vector<64x8xbf16>
    %cst_55 = arith.constant 0.000000e+00 : f32
    %184 = vector.broadcast %cst_55 : f32 to vector<64x8xf32>
    %cst_56 = arith.constant dense<0.000000e+00> : vector<64x64xf32>
    %185 = tpu.matmul %167, %175, %cst_56 {dimension_numbers = #tpu.dot_dimension_numbers<[1], [1], [0], [0], [0, 0, 1, 0], [], []>} : vector<64x8xbf16>, vector<64x8xbf16>, vector<64x64xf32> -> vector<64x64xf32>
    %cst_57 = arith.constant dense<0xFF800000> : vector<64xf32>
    %186 = vector.multi_reduction <maximumf>, %185, %cst_57 [0] : vector<64x64xf32> to vector<64xf32>
    %187 = vector.shape_cast %186 : vector<64xf32> to vector<1x64xf32>
    %188 = vector.broadcast %187 : vector<1x64xf32> to vector<64x64xf32>
    %189 = arith.subf %185, %188 : vector<64x64xf32>
    %190 = math.exp %189 : vector<64x64xf32>
    %cst_58 = arith.constant dense<0.000000e+00> : vector<64xf32>
    %191 = vector.multi_reduction <add>, %190, %cst_58 [0] : vector<64x64xf32> to vector<64xf32>
    %192 = vector.shape_cast %191 : vector<64xf32> to vector<1x64xf32>
    %193 = tpu.reciprocal %192 {approx = true} : vector<1x64xf32> -> vector<1x64xf32>
    %194 = vector.broadcast %193 : vector<1x64xf32> to vector<64x64xf32>
    %195 = arith.mulf %190, %194 : vector<64x64xf32>
    %196 = arith.truncf %195 : vector<64x64xf32> to vector<64x64xbf16>
    %cst_59 = arith.constant dense<0.000000e+00> : vector<64x8xf32>
    %197 = tpu.matmul %196, %183, %cst_59 {dimension_numbers = #tpu.dot_dimension_numbers<[1], [0], [0], [1], [0, 0, 1, 1], [], []>} : vector<64x64xbf16>, vector<64x8xbf16>, vector<64x8xf32> -> vector<64x8xf32>
    %198 = arith.addf %184, %197 : vector<64x8xf32>
    %199 = vector.extract_strided_slice %2 {offsets = [1, 0, 0], sizes = [1, 16, 8], strides = [1, 1, 1]} : vector<2x16x8xbf16> to vector<1x16x8xbf16>
    %200 = vector.shape_cast %199 : vector<1x16x8xbf16> to vector<16x8xbf16>
    %201 = arith.truncf %198 : vector<64x8xf32> to vector<64x8xbf16>
    %cst_60 = arith.constant dense<0.000000e+00> : vector<16x64xf32>
    %202 = tpu.matmul %200, %201, %cst_60 {dimension_numbers = #tpu.dot_dimension_numbers<[1], [1], [0], [0], [0, 0, 1, 0], [], []>} : vector<16x8xbf16>, vector<64x8xbf16>, vector<16x64xf32> -> vector<16x64xf32>
    %203 = arith.addf %157, %202 : vector<16x64xf32>
    %204 = vector.broadcast %3 : vector<16x1xf32> to vector<16x64xf32>
    %205 = arith.addf %203, %204 : vector<16x64xf32>
    %206 = arith.addf %205, %108 : vector<16x64xf32>
    %c1_61 = arith.constant 1 : index
    %c0_62 = arith.constant 0 : index
    %c0_63 = arith.constant 0 : index
    %207 = vector.load %arg6[%c1_61, %c0_62, %c0_63] : memref<2x16x64xf32, #tpu.memory_space<vmem>>, vector<1x16x64xf32>
    %208 = vector.shape_cast %207 : vector<1x16x64xf32> to vector<16x64xf32>
    %209 = vector.shape_cast %206 : vector<16x64xf32> to vector<1x16x64xf32>
    tpu.vector_store %arg6[%c1_61, %c0_62, %c0_63], %209 {strides = array<i32>} : memref<2x16x64xf32, #tpu.memory_space<vmem>>, vector<1x16x64xf32>,
    return
  }
  func.func @transform_0(%arg0: i32) -> (i32, i32, i32) {
    %c0_i32 = arith.constant 0 : i32
    %c0_i32_0 = arith.constant 0 : i32
    %c0_i32_1 = arith.constant 0 : i32
    return %arg0, %c0_i32, %c0_i32_0 : i32, i32, i32
  }
  func.func @transform_1(%arg0: i32) -> (i32, i32, i32, i32) {
    %c0_i32 = arith.constant 0 : i32
    %c0_i32_0 = arith.constant 0 : i32
    %c0_i32_1 = arith.constant 0 : i32
    %c0_i32_2 = arith.constant 0 : i32
    %c0_i32_3 = arith.constant 0 : i32
    return %c0_i32, %c0_i32_0, %c0_i32_1, %c0_i32_2 : i32, i32, i32, i32
  }
  func.func @transform_2(%arg0: i32) -> (i32, i32, i32, i32) {
    %c0_i32 = arith.constant 0 : i32
    %c0_i32_0 = arith.constant 0 : i32
    %c0_i32_1 = arith.constant 0 : i32
    %c0_i32_2 = arith.constant 0 : i32
    %c0_i32_3 = arith.constant 0 : i32
    return %c0_i32, %c0_i32_0, %c0_i32_1, %c0_i32_2 : i32, i32, i32, i32
  }
  func.func @transform_3(%arg0: i32) -> (i32, i32, i32) {
    %c0_i32 = arith.constant 0 : i32
    %c0_i32_0 = arith.constant 0 : i32
    %c0_i32_1 = arith.constant 0 : i32
    %c0_i32_2 = arith.constant 0 : i32
    return %c0_i32, %c0_i32_0, %c0_i32_1 : i32, i32, i32
  }
  func.func @transform_4(%arg0: i32) -> (i32, i32) {
    %c0_i32 = arith.constant 0 : i32
    %c0_i32_0 = arith.constant 0 : i32
    %c0_i32_1 = arith.constant 0 : i32
    return %c0_i32, %c0_i32_0 : i32, i32
  }
  func.func @transform_5(%arg0: i32) -> (i32, i32, i32) {
    %c0_i32 = arith.constant 0 : i32
    %c0_i32_0 = arith.constant 0 : i32
    %c0_i32_1 = arith.constant 0 : i32
    return %arg0, %c0_i32, %c0_i32_0 : i32, i32, i32
  }
}

</mosaic_0001>

<llo_original>
// kernel: tpu_custom_call.1
$region0: #{tpu_custom_call.1}
  #allocation0 [shape = 'u32[]', space=smem, size = 0x4, offset = 0x4, fixed_abs, tag = 'smem constant byte address 0x4 - core index']
  #allocation1 [shape = 'u32[144,128]{1,0:T(1,128)}', space=vmem, size = 0x12000, scoped, tag = 'internal scratch']
  %s0 = inlined_call_operand.vmem [shape: f32[2,16,64], index: 0, kind: input, shape index: {}]
  %s1 = inlined_call_operand.hbm [shape: bf16[3,2,8,16], index: 1, kind: input, shape index: {}]
  %s2 = inlined_call_operand.vmem [shape: f32[3,2,1,8], index: 2, kind: input, shape index: {}]
  %s3 = inlined_call_operand.vmem [shape: bf16[2,16,8], index: 3, kind: input, shape index: {}]
  %s4 = inlined_call_operand.vmem [shape: f32[16,1], index: 4, kind: input, shape index: {}]
  %s5 = inlined_call_operand.hbm [shape: f32[2,16,64], index: 5, kind: output, shape index: {}]
  %s6 = sld [smem:[#allocation0]]
  $region34: #{tpu_custom_call.1} parent=0
    _
  %s8 = ssub.s32 1, %s6
  %s9 = scalar_select 0, %s8, %s6
  $region1: #{tpu_custom_call.1} parent=0
    #allocation2 [shape = 'u8[12288]{0}', space=vmem, size = 0x3000, scoped, tag = 'input window, operand 1, single buffered']
    #allocation3 [shape = 's32[1]{0}', space=sflag, size = 0x4, scoped, tag = 'scoped memory for tpu_custom_call.1']
    #allocation4 [shape = 's32[1]{0}', space=sflag, size = 0x4, scoped, tag = 'scoped memory for tpu_custom_call.1']
    #allocation5 [shape = 'u8[16384]{0}', space=vmem, size = 0x4000, scoped, tag = 'output window, operand 0, single buffered']
    %10 = vsyncpa [#allocation3], 0
    %11 = vsyncpa [#allocation4], 0
    // Predicated region
    $region2: #{tpu_custom_call.1} parent=1 // pred_check
      _
    $region3: #{tpu_custom_call.1} parent=1 // pred_check_branch
      %13 = sbr.rel (0) target = $region5
    $region4: #{tpu_custom_call.1} parent=1 // pred_region
      _
    $region5: #{tpu_custom_call.1} parent=1 // pred_fallthru
      _
    // Predicated region
    $region6: #{tpu_custom_call.1} parent=1 // pred_check
      _
    $region7: #{tpu_custom_call.1} parent=1 // pred_check_branch
      %15 = sbr.rel (0) target = $region9
    $region8: #{tpu_custom_call.1} parent=1 // pred_region
      %s17 = ssub.s32 384, 384
      %18 = vsyncadd [#allocation3], %s17
      %s19 = sshll.u32 [#allocation2], 4
      %s20 = int_to_ptr.vmem [resolvable:$true] %s19
      %25 = dma.hbm_to_vmem [thread:$0]  %s1, 384, %s20, [#allocation3], 64, 64, 4
    $region9: #{tpu_custom_call.1} parent=1 // pred_fallthru
      _
    // Predicated region
    $region10: #{tpu_custom_call.1} parent=1 // pred_check
      _
    $region11: #{tpu_custom_call.1} parent=1 // pred_check_branch
      %27 = sbr.rel (0) target = $region13
    $region12: #{tpu_custom_call.1} parent=1 // pred_region
      _
    $region13: #{tpu_custom_call.1} parent=1 // pred_fallthru
      _
    // Predicated region
    $region14: #{tpu_custom_call.1} parent=1 // pred_check
      _
    $region15: #{tpu_custom_call.1} parent=1 // pred_check_branch
      %29 = sbr.rel (0) target = $region17
    $region16: #{tpu_custom_call.1} parent=1 // pred_region
      _
    $region17: #{tpu_custom_call.1} parent=1 // pred_fallthru
      _
    // Predicated region
    $region18: #{tpu_custom_call.1} parent=1 // pred_check
      _
    $region19: #{tpu_custom_call.1} parent=1 // pred_check_branch
      %31 = sbr.rel (0) target = $region21
    $region20: #{tpu_custom_call.1} parent=1 // pred_region
      _
    $region21: #{tpu_custom_call.1} parent=1 // pred_fallthru
      _
    // Predicated region
    $region22: #{tpu_custom_call.1} parent=1 // pred_check
      _
    $region23: #{tpu_custom_call.1} parent=1 // pred_check_branch
      %33 = sbr.rel (0) target = $region25
    $region24: #{tpu_custom_call.1} parent=1 // pred_region
      %34 = dma.done [#allocation3], 384
    $region25: #{tpu_custom_call.1} parent=1 // pred_fallthru
      _
    %v36 = vld [vmem:[#allocation2] sm:$0xf]
    %v37 = vld [vmem:[#allocation2 + $0x4] sm:$0xf]
    %v38 = vld [vmem:[#allocation2 + $0x8] sm:$0xf]
    %v39 = vld [vmem:[#allocation2 + $0xc] sm:$0xf]
    %v40 = vld [vmem:[#allocation2 + $0x10] sm:$0xf]
    %v41 = vld [vmem:[#allocation2 + $0x14] sm:$0xf]
    %v42 = vld [vmem:[%s2] sm:$0x1]
    %v43 = vld [vmem:[%s2 + $0x1] sm:$0x1]
    %v44 = vld [vmem:[%s2 + $0x2] sm:$0x1]
    %v45 = vld [vmem:[%s2 + $0x3] sm:$0x1]
    %v46 = vld [vmem:[%s2 + $0x4] sm:$0x1]
    %v47 = vld [vmem:[%s2 + $0x5] sm:$0x1]
    %v48 = vld [vmem:[%s3] sm:$0xf]
    %v49 = vld [vmem:[%s3 + $0x4] sm:$0xf]
    %v50 = vld [vmem:[%s3 + $0x8] sm:$0xf]
    %v51 = vld [vmem:[%s3 + $0xc] sm:$0xf]
    %v52 = vld [vmem:[%s4] sm:$0xff]
    %v53 = vld [vmem:[%s4 + $0x8] sm:$0xff]
    %v54 = vld [vmem:[%s0] sm:$0xff]
    %v55 = vld [vmem:[%s0 + $0x8] sm:$0xff]
    %56 = vxpose.xlu0.b32.start [1/16] %v54, 128
    %57 = vxpose.xlu0.b32.cont [2/16] %v55, 128
    %58 = vxpose.xlu0.b32.cont [3/16] 0.0, 128
    %59 = vxpose.xlu0.b32.cont [4/16] 0.0, 128
    %60 = vxpose.xlu0.b32.cont [5/16] 0.0, 128
    %61 = vxpose.xlu0.b32.cont [6/16] 0.0, 128
    %62 = vxpose.xlu0.b32.cont [7/16] 0.0, 128
    %63 = vxpose.xlu0.b32.cont [8/16] 0.0, 128
    %64 = vxpose.xlu0.b32.cont [9/16] 0.0, 128
    %65 = vxpose.xlu0.b32.cont [10/16] 0.0, 128
    %66 = vxpose.xlu0.b32.cont [11/16] 0.0, 128
    %67 = vxpose.xlu0.b32.cont [12/16] 0.0, 128
    %68 = vxpose.xlu0.b32.cont [13/16] 0.0, 128
    %69 = vxpose.xlu0.b32.cont [14/16] 0.0, 128
    %70 = vxpose.xlu0.b32.cont [15/16] 0.0, 128
    %71 = vxpose.xlu0.b32.end [16/16] 0.0, 128
    %v72 = vpop.trf.xlu0
    %v73 = vpop.trf.xlu0
    %v74 = vpop.trf.xlu0
    %v75 = vpop.trf.xlu0
    %v76 = vpop.trf.xlu0
    %v77 = vpop.trf.xlu0
    %v78 = vpop.trf.xlu0
    %v79 = vpop.trf.xlu0
    %v80 = vpop.trf.xlu0
    %v81 = vpop.trf.xlu0
    %v82 = vpop.trf.xlu0
    %v83 = vpop.trf.xlu0
    %v84 = vpop.trf.xlu0
    %v85 = vpop.trf.xlu0
    %v86 = vpop.trf.xlu0
    %v87 = vpop.trf.xlu0
    %v88 = vpack.c.bf16 %v73, %v72
    %v89 = vpack.c.bf16 %v75, %v74
    %v90 = vpack.c.bf16 %v77, %v76
    %v91 = vpack.c.bf16 %v79, %v78
    %v93 = vlaneseq
    %v94 = vshrl.u32 %v93, 7
    %v95 = vsub.s32 0, %v94
    %v96 = vrot.slane %v42, %v95
    %vm98 = vcmask 130048
    %v100 = vsel %vm98, %v88, 0
    %v103 = vsel %vm98, %v89, 0
    %v106 = vsel %vm98, %v90, 0
    %v109 = vsel %vm98, %v91, 0
    %v112 = vsel %vm98, %v36, 0
    %114 = vmatprep.subr.bf16.mxu0 0
    %115 = vmatpush1.bf16.xpose.msra.mxu0 %v112
    %116 = vmatprep.subr.bf16.mxu0 0
    %117 = vmatpush1.bf16.xpose.msra.mxu0 0
    %118 = vmatprep.subr.bf16.mxu0 0
    %119 = vmatpush1.bf16.xpose.msra.mxu0 0
    %120 = vmatprep.subr.bf16.mxu0 0
    %121 = vmatpush1.bf16.xpose.msra.mxu0 0
    %122 = vmatprep.subr.bf16.mxu0 0
    %123 = vmatpush1.bf16.xpose.msra.mxu0 0
    %124 = vmatprep.subr.bf16.mxu0 0
    %125 = vmatpush1.bf16.xpose.msra.mxu0 0
    %126 = vmatprep.subr.bf16.mxu0 0
    %127 = vmatpush1.bf16.xpose.msra.mxu0 0
    %128 = vmatprep.subr.bf16.mxu0 0
    %129 = vmatpush1.bf16.xpose.msra.mxu0 0
    %130 = vmatprep.subr.bf16.mxu0 0
    %131 = vmatpush1.bf16.xpose.msra.mxu0 0
    %132 = vmatprep.subr.bf16.mxu0 0
    %133 = vmatpush1.bf16.xpose.msra.mxu0 0
    %134 = vmatprep.subr.bf16.mxu0 0
    %135 = vmatpush1.bf16.xpose.msra.mxu0 0
    %136 = vmatprep.subr.bf16.mxu0 0
    %137 = vmatpush1.bf16.xpose.msra.mxu0 0
    %138 = vmatprep.subr.bf16.mxu0 0
    %139 = vmatpush1.bf16.xpose.msra.mxu0 0
    %140 = vmatprep.subr.bf16.mxu0 0
    %141 = vmatpush1.bf16.xpose.msra.mxu0 0
    %142 = vmatprep.subr.bf16.mxu0 0
    %143 = vmatpush1.bf16.xpose.msra.mxu0 0
    %144 = vmatprep.subr.bf16.mxu0 0
    %145 = vmatpush1.bf16.xpose.msra.mxu0 0
    %146 = vmatprep.mubr.bf16.mxu0 0
    %147 = vmatmul.mubr.bf16.gmra.mrb[0].mxu0 %v100
    %v148 = vpop.f32.mrb[0].mxu0
    %v149 = vadd.f32 %v96, %v148
    %v150 = vpop.f32.mrb[0].mxu0
    %v151 = vpop.f32.mrb[0].mxu0
    %v152 = vadd.f32 %v96, %v151
    %v153 = vpop.f32.mrb[0].mxu0
    %154 = vmatprep.mubr.bf16.mxu0 0
    %155 = vmatmul.mubr.bf16.gmra.mrb[0].mxu0 %v103
    %v156 = vpop.f32.mrb[0].mxu0
    %v157 = vadd.f32 %v96, %v156
    %v158 = vpop.f32.mrb[0].mxu0
    %v159 = vpop.f32.mrb[0].mxu0
    %v160 = vadd.f32 %v96, %v159
    %v161 = vpop.f32.mrb[0].mxu0
    %162 = vmatprep.mubr.bf16.mxu0 0
    %163 = vmatmul.mubr.bf16.gmra.mrb[0].mxu0 %v106
    %v164 = vpop.f32.mrb[0].mxu0
    %v165 = vadd.f32 %v96, %v164
    %v166 = vpop.f32.mrb[0].mxu0
    %v167 = vpop.f32.mrb[0].mxu0
    %v168 = vadd.f32 %v96, %v167
    %v169 = vpop.f32.mrb[0].mxu0
    %170 = vmatprep.mubr.bf16.mxu0 0
    %171 = vmatmul.mubr.bf16.gmra.mrb[0].mxu0 %v109
    %v172 = vpop.f32.mrb[0].mxu0
    %v173 = vadd.f32 %v96, %v172
    %v174 = vpop.f32.mrb[0].mxu0
    %v175 = vpop.f32.mrb[0].mxu0
    %v176 = vadd.f32 %v96, %v175
    %v177 = vpop.f32.mrb[0].mxu0
    %178 = vdwg.mxu0
    %v179 = vmul.f32 %v149, 0.35355338
    %v180 = vmul.f32 %v152, 0.35355338
    %v181 = vmul.f32 %v157, 0.35355338
    %v182 = vmul.f32 %v160, 0.35355338
    %v183 = vmul.f32 %v165, 0.35355338
    %v184 = vmul.f32 %v168, 0.35355338
    %v185 = vmul.f32 %v173, 0.35355338
    %v186 = vmul.f32 %v176, 0.35355338
    %v187 = vpack.c.bf16 %v180, %v179
    %v188 = vpack.c.bf16 %v182, %v181
    %v189 = vpack.c.bf16 %v184, %v183
    %v190 = vpack.c.bf16 %v186, %v185
    %v192 = vlaneseq
    %v193 = vshrl.u32 %v192, 7
    %v194 = vsub.s32 0, %v193
    %v195 = vrot.slane %v44, %v194
    %v198 = vsel %vm98, %v38, 0
    %200 = vmatprep.subr.bf16.mxu0 0
    %201 = vmatpush1.bf16.xpose.msra.mxu0 %v198
    %202 = vmatprep.subr.bf16.mxu0 0
    %203 = vmatpush1.bf16.xpose.msra.mxu0 0
    %204 = vmatprep.subr.bf16.mxu0 0
    %205 = vmatpush1.bf16.xpose.msra.mxu0 0
    %206 = vmatprep.subr.bf16.mxu0 0
    %207 = vmatpush1.bf16.xpose.msra.mxu0 0
    %208 = vmatprep.subr.bf16.mxu0 0
    %209 = vmatpush1.bf16.xpose.msra.mxu0 0
    %210 = vmatprep.subr.bf16.mxu0 0
    %211 = vmatpush1.bf16.xpose.msra.mxu0 0
    %212 = vmatprep.subr.bf16.mxu0 0
    %213 = vmatpush1.bf16.xpose.msra.mxu0 0
    %214 = vmatprep.subr.bf16.mxu0 0
    %215 = vmatpush1.bf16.xpose.msra.mxu0 0
    %216 = vmatprep.subr.bf16.mxu0 0
    %217 = vmatpush1.bf16.xpose.msra.mxu0 0
    %218 = vmatprep.subr.bf16.mxu0 0
    %219 = vmatpush1.bf16.xpose.msra.mxu0 0
    %220 = vmatprep.subr.bf16.mxu0 0
    %221 = vmatpush1.bf16.xpose.msra.mxu0 0
    %222 = vmatprep.subr.bf16.mxu0 0
    %223 = vmatpush1.bf16.xpose.msra.mxu0 0
    %224 = vmatprep.subr.bf16.mxu0 0
    %225 = vmatpush1.bf16.xpose.msra.mxu0 0
    %226 = vmatprep.subr.bf16.mxu0 0
    %227 = vmatpush1.bf16.xpose.msra.mxu0 0
    %228 = vmatprep.subr.bf16.mxu0 0
    %229 = vmatpush1.bf16.xpose.msra.mxu0 0
    %230 = vmatprep.subr.bf16.mxu0 0
    %231 = vmatpush1.bf16.xpose.msra.mxu0 0
    %232 = vmatprep.mubr.bf16.mxu0 0
    %233 = vmatmul.mubr.bf16.gmra.mrb[0].mxu0 %v100
    %v234 = vpop.f32.mrb[0].mxu0
    %v235 = vadd.f32 %v195, %v234
    %v236 = vpop.f32.mrb[0].mxu0
    %v237 = vpop.f32.mrb[0].mxu0
    %v238 = vadd.f32 %v195, %v237
    %v239 = vpop.f32.mrb[0].mxu0
    %240 = vmatprep.mubr.bf16.mxu0 0
    %241 = vmatmul.mubr.bf16.gmra.mrb[0].mxu0 %v103
    %v242 = vpop.f32.mrb[0].mxu0
    %v243 = vadd.f32 %v195, %v242
    %v244 = vpop.f32.mrb[0].mxu0
    %v245 = vpop.f32.mrb[0].mxu0
    %v246 = vadd.f32 %v195, %v245
    %v247 = vpop.f32.mrb[0].mxu0
    %248 = vmatprep.mubr.bf16.mxu0 0
    %249 = vmatmul.mubr.bf16.gmra.mrb[0].mxu0 %v106
    %v250 = vpop.f32.mrb[0].mxu0
    %v251 = vadd.f32 %v195, %v250
    %v252 = vpop.f32.mrb[0].mxu0
    %v253 = vpop.f32.mrb[0].mxu0
    %v254 = vadd.f32 %v195, %v253
    %v255 = vpop.f32.mrb[0].mxu0
    %256 = vmatprep.mubr.bf16.mxu0 0
    %257 = vmatmul.mubr.bf16.gmra.mrb[0].mxu0 %v109
    %v258 = vpop.f32.mrb[0].mxu0
    %v259 = vadd.f32 %v195, %v258
    %v260 = vpop.f32.mrb[0].mxu0
    %v261 = vpop.f32.mrb[0].mxu0
    %v262 = vadd.f32 %v195, %v261
    %v263 = vpop.f32.mrb[0].mxu0
    %264 = vdwg.mxu0
    %v265 = vpack.c.bf16 %v238, %v235
    %v266 = vpack.c.bf16 %v246, %v243
    %v267 = vpack.c.bf16 %v254, %v251
    %v268 = vpack.c.bf16 %v262, %v259
    %v270 = vlaneseq
    %v271 = vshrl.u32 %v270, 7
    %v272 = vsub.s32 0, %v271
    %v273 = vrot.slane %v46, %v272
    %v276 = vsel %vm98, %v40, 0
    %278 = vmatprep.subr.bf16.mxu0 0
    %279 = vmatpush1.bf16.xpose.msra.mxu0 %v276
    %280 = vmatprep.subr.bf16.mxu0 0
    %281 = vmatpush1.bf16.xpose.msra.mxu0 0
    %282 = vmatprep.subr.bf16.mxu0 0
    %283 = vmatpush1.bf16.xpose.msra.mxu0 0
    %284 = vmatprep.subr.bf16.mxu0 0
    %285 = vmatpush1.bf16.xpose.msra.mxu0 0
    %286 = vmatprep.subr.bf16.mxu0 0
    %287 = vmatpush1.bf16.xpose.msra.mxu0 0
    %288 = vmatprep.subr.bf16.mxu0 0
    %289 = vmatpush1.bf16.xpose.msra.mxu0 0
    %290 = vmatprep.subr.bf16.mxu0 0
    %291 = vmatpush1.bf16.xpose.msra.mxu0 0
    %292 = vmatprep.subr.bf16.mxu0 0
    %293 = vmatpush1.bf16.xpose.msra.mxu0 0
    %294 = vmatprep.subr.bf16.mxu0 0
    %295 = vmatpush1.bf16.xpose.msra.mxu0 0
    %296 = vmatprep.subr.bf16.mxu0 0
    %297 = vmatpush1.bf16.xpose.msra.mxu0 0
    %298 = vmatprep.subr.bf16.mxu0 0
    %299 = vmatpush1.bf16.xpose.msra.mxu0 0
    %300 = vmatprep.subr.bf16.mxu0 0
    %301 = vmatpush1.bf16.xpose.msra.mxu0 0
    %302 = vmatprep.subr.bf16.mxu0 0
    %303 = vmatpush1.bf16.xpose.msra.mxu0 0
    %304 = vmatprep.subr.bf16.mxu0 0
    %305 = vmatpush1.bf16.xpose.msra.mxu0 0
    %306 = vmatprep.subr.bf16.mxu0 0
    %307 = vmatpush1.bf16.xpose.msra.mxu0 0
    %308 = vmatprep.subr.bf16.mxu0 0
    %309 = vmatpush1.bf16.xpose.msra.mxu0 0
    %310 = vmatprep.mubr.bf16.mxu0 0
    %311 = vmatmul.mubr.bf16.gmra.mrb[0].mxu0 %v100
    %v312 = vpop.f32.mrb[0].mxu0
    %v313 = vadd.f32 %v273, %v312
    %v314 = vpop.f32.mrb[0].mxu0
    %v315 = vpop.f32.mrb[0].mxu0
    %v316 = vadd.f32 %v273, %v315
    %v317 = vpop.f32.mrb[0].mxu0
    %318 = vmatprep.mubr.bf16.mxu0 0
    %319 = vmatmul.mubr.bf16.gmra.mrb[0].mxu0 %v103
    %v320 = vpop.f32.mrb[0].mxu0
    %v321 = vadd.f32 %v273, %v320
    %v322 = vpop.f32.mrb[0].mxu0
    %v323 = vpop.f32.mrb[0].mxu0
    %v324 = vadd.f32 %v273, %v323
    %v325 = vpop.f32.mrb[0].mxu0
    %326 = vmatprep.mubr.bf16.mxu0 0
    %327 = vmatmul.mubr.bf16.gmra.mrb[0].mxu0 %v106
    %v328 = vpop.f32.mrb[0].mxu0
    %v329 = vadd.f32 %v273, %v328
    %v330 = vpop.f32.mrb[0].mxu0
    %v331 = vpop.f32.mrb[0].mxu0
    %v332 = vadd.f32 %v273, %v331
    %v333 = vpop.f32.mrb[0].mxu0
    %334 = vmatprep.mubr.bf16.mxu0 0
    %335 = vmatmul.mubr.bf16.gmra.mrb[0].mxu0 %v109
    %v336 = vpop.f32.mrb[0].mxu0
    %v337 = vadd.f32 %v273, %v336
    %v338 = vpop.f32.mrb[0].mxu0
    %v339 = vpop.f32.mrb[0].mxu0
    %v340 = vadd.f32 %v273, %v339
    %v341 = vpop.f32.mrb[0].mxu0
    %342 = vdwg.mxu0
    %v343 = vpack.c.bf16 %v316, %v313
    %v344 = vpack.c.bf16 %v324, %v321
    %v345 = vpack.c.bf16 %v332, %v329
    %v346 = vpack.c.bf16 %v340, %v337
    %vm347 = vcmask 64512
    %v349 = vsel %vm347, %v187, 0
    %v352 = vsel %vm347, %v188, 0
    %v355 = vsel %vm347, %v189, 0
    %v358 = vsel %vm347, %v190, 0
    %v361 = vsel %vm347, %v265, 0
    %v364 = vsel %vm347, %v266, 0
    %v367 = vsel %vm347, %v267, 0
    %v370 = vsel %vm347, %v268, 0
    %372 = vmatprep.subr.bf16.mxu0 0
    %373 = vmatpush1.bf16.xpose.msra.mxu0 %v361
    %374 = vmatprep.subr.bf16.mxu0 0
    %375 = vmatpush1.bf16.xpose.msra.mxu0 %v364
    %376 = vmatprep.subr.bf16.mxu0 0
    %377 = vmatpush1.bf16.xpose.msra.mxu0 %v367
    %378 = vmatprep.subr.bf16.mxu0 0
    %379 = vmatpush1.bf16.xpose.msra.mxu0 %v370
    %380 = vmatprep.subr.bf16.mxu0 0
    %381 = vmatpush1.bf16.xpose.msra.mxu0 0
    %382 = vmatprep.subr.bf16.mxu0 0
    %383 = vmatpush1.bf16.xpose.msra.mxu0 0
    %384 = vmatprep.subr.bf16.mxu0 0
    %385 = vmatpush1.bf16.xpose.msra.mxu0 0
    %386 = vmatprep.subr.bf16.mxu0 0
    %387 = vmatpush1.bf16.xpose.msra.mxu0 0
    %388 = vmatprep.subr.bf16.mxu0 0
    %389 = vmatpush1.bf16.xpose.msra.mxu0 0
    %390 = vmatprep.subr.bf16.mxu0 0
    %391 = vmatpush1.bf16.xpose.msra.mxu0 0
    %392 = vmatprep.subr.bf16.mxu0 0
    %393 = vmatpush1.bf16.xpose.msra.mxu0 0
    %394 = vmatprep.subr.bf16.mxu0 0
    %395 = vmatpush1.bf16.xpose.msra.mxu0 0
    %396 = vmatprep.subr.bf16.mxu0 0
    %397 = vmatpush1.bf16.xpose.msra.mxu0 0
    %398 = vmatprep.subr.bf16.mxu0 0
    %399 = vmatpush1.bf16.xpose.msra.mxu0 0
    %400 = vmatprep.subr.bf16.mxu0 0
    %401 = vmatpush1.bf16.xpose.msra.mxu0 0
    %402 = vmatprep.subr.bf16.mxu0 0
    %403 = vmatpush1.bf16.xpose.msra.mxu0 0
    %404 = vmatprep.mubr.bf16.mxu0 0
    %405 = vmatmul.mubr.bf16.gmra.mrb[0].mxu0 %v349
    %v406 = vpop.f32.mrb[0].mxu0
    %v407 = vadd.f32 0.0, %v406
    %v408 = vpop.f32.mrb[0].mxu0
    %v409 = vpop.f32.mrb[0].mxu0
    %v410 = vadd.f32 0.0, %v409
    %v411 = vpop.f32.mrb[0].mxu0
    %412 = vmatprep.mubr.bf16.mxu0 0
    %413 = vmatmul.mubr.bf16.gmra.mrb[0].mxu0 %v352
    %v414 = vpop.f32.mrb[0].mxu0
    %v415 = vadd.f32 0.0, %v414
    %v416 = vpop.f32.mrb[0].mxu0
    %v417 = vpop.f32.mrb[0].mxu0
    %v418 = vadd.f32 0.0, %v417
    %v419 = vpop.f32.mrb[0].mxu0
    %420 = vmatprep.mubr.bf16.mxu0 0
    %421 = vmatmul.mubr.bf16.gmra.mrb[0].mxu0 %v355
    %v422 = vpop.f32.mrb[0].mxu0
    %v423 = vadd.f32 0.0, %v422
    %v424 = vpop.f32.mrb[0].mxu0
    %v425 = vpop.f32.mrb[0].mxu0
    %v426 = vadd.f32 0.0, %v425
    %v427 = vpop.f32.mrb[0].mxu0
    %428 = vmatprep.mubr.bf16.mxu0 0
    %429 = vmatmul.mubr.bf16.gmra.mrb[0].mxu0 %v358
    %v430 = vpop.f32.mrb[0].mxu0
    %v431 = vadd.f32 0.0, %v430
    %v432 = vpop.f32.mrb[0].mxu0
    %v433 = vpop.f32.mrb[0].mxu0
    %v434 = vadd.f32 0.0, %v433
    %v435 = vpop.f32.mrb[0].mxu0
    %436 = vdwg.mxu0
    %vm437 = vcmask 523264
    %v438 = vsel %vm437, %v407, -inf
    %v439 = vsel %vm437, %v410, -inf
    %v440 = vsel %vm437, %v415, -inf
    %v441 = vsel %vm437, %v418, -inf
    %v442 = vsel %vm437, %v423, -inf
    %v443 = vmax.f32 %v438, %v442
    %v444 = vsel %vm437, %v426, -inf
    %v445 = vmax.f32 %v439, %v444
    %v446 = vsel %vm437, %v431, -inf
    %v447 = vmax.f32 %v440, %v446
    %v448 = vsel %vm437, %v434, -inf
    %v449 = vmax.f32 %v441, %v448
    %v450 = vmax.f32 %v443, %v445
    %v451 = vmax.f32 %v447, %v449
    %v452 = vmax.f32 %v450, %v451
    %v453 = vrot.slane %v452, 4
    %v454 = vmax.f32 %v452, %v453
    %v455 = vrot.slane %v454, 2
    %v456 = vmax.f32 %v454, %v455
    %v457 = vrot.slane %v456, 1
    %v458 = vmax.f32 %v456, %v457
    %v459 = vsub.f32 %v407, %v458
    %v460 = vsub.f32 %v410, %v458
    %v461 = vsub.f32 %v415, %v458
    %v462 = vsub.f32 %v418, %v458
    %v463 = vsub.f32 %v423, %v458
    %v464 = vsub.f32 %v426, %v458
    %v465 = vsub.f32 %v431, %v458
    %v466 = vsub.f32 %v434, %v458
    %v467 = vmul.f32 %v459, 1.442695
    %v468 = vpow.pop %v467
    %v469 = vmul.f32 %v460, 1.442695
    %v470 = vpow.pop %v469
    %v471 = vmul.f32 %v461, 1.442695
    %v472 = vpow.pop %v471
    %v473 = vmul.f32 %v462, 1.442695
    %v474 = vpow.pop %v473
    %v475 = vmul.f32 %v463, 1.442695
    %v476 = vpow.pop %v475
    %v477 = vmul.f32 %v464, 1.442695
    %v478 = vpow.pop %v477
    %v479 = vmul.f32 %v465, 1.442695
    %v480 = vpow.pop %v479
    %v481 = vmul.f32 %v466, 1.442695
    %v482 = vpow.pop %v481
    %v483 = vsel %vm437, %v468, 0.0
    %v484 = vsel %vm437, %v470, 0.0
    %v485 = vadd.f32 %v483, %v484
    %v486 = vsel %vm437, %v472, 0.0
    %v487 = vadd.f32 %v485, %v486
    %v488 = vsel %vm437, %v474, 0.0
    %v489 = vadd.f32 %v487, %v488
    %v490 = vsel %vm437, %v476, 0.0
    %v491 = vadd.f32 %v489, %v490
    %v492 = vsel %vm437, %v478, 0.0
    %v493 = vadd.f32 %v491, %v492
    %v494 = vsel %vm437, %v480, 0.0
    %v495 = vadd.f32 %v493, %v494
    %v496 = vsel %vm437, %v482, 0.0
    %v497 = vadd.f32 %v495, %v496
    %v498 = vrot.slane %v497, 4
    %v499 = vadd.f32 %v497, %v498
    %v500 = vrot.slane %v499, 2
    %v501 = vadd.f32 %v499, %v500
    %v502 = vrot.slane %v501, 1
    %v503 = vadd.f32 %v501, %v502
    %v504 = vrcp.pop %v503
    %v505 = vmul.f32 %v468, %v504
    %v506 = vmul.f32 %v470, %v504
    %v507 = vmul.f32 %v472, %v504
    %v508 = vmul.f32 %v474, %v504
    %v509 = vmul.f32 %v476, %v504
    %v510 = vmul.f32 %v478, %v504
    %v511 = vmul.f32 %v480, %v504
    %v512 = vmul.f32 %v482, %v504
    %v513 = vpack.c.bf16 %v506, %v505
    %v514 = vpack.c.bf16 %v508, %v507
    %v515 = vpack.c.bf16 %v510, %v509
    %v516 = vpack.c.bf16 %v512, %v511
    %v518 = vsel %vm437, %v513, 0
    %v521 = vsel %vm437, %v514, 0
    %v524 = vsel %vm437, %v515, 0
    %v527 = vsel %vm437, %v516, 0
    %529 = vmatprep.subr.bf16.mxu0 0
    %530 = vmatpush1.bf16.msra.mxu0 %v343
    %531 = vmatprep.subr.bf16.mxu0 0
    %532 = vmatpush1.bf16.msra.mxu0 %v344
    %533 = vmatprep.subr.bf16.mxu0 0
    %534 = vmatpush1.bf16.msra.mxu0 %v345
    %535 = vmatprep.subr.bf16.mxu0 0
    %536 = vmatpush1.bf16.msra.mxu0 %v346
    %537 = vmatprep.subr.bf16.mxu0 0
    %538 = vmatpush1.bf16.msra.mxu0 0
    %539 = vmatprep.subr.bf16.mxu0 0
    %540 = vmatpush1.bf16.msra.mxu0 0
    %541 = vmatprep.subr.bf16.mxu0 0
    %542 = vmatpush1.bf16.msra.mxu0 0
    %543 = vmatprep.subr.bf16.mxu0 0
    %544 = vmatpush1.bf16.msra.mxu0 0
    %545 = vmatprep.subr.bf16.mxu0 0
    %546 = vmatpush1.bf16.msra.mxu0 0
    %547 = vmatprep.subr.bf16.mxu0 0
    %548 = vmatpush1.bf16.msra.mxu0 0
    %549 = vmatprep.subr.bf16.mxu0 0
    %550 = vmatpush1.bf16.msra.mxu0 0
    %551 = vmatprep.subr.bf16.mxu0 0
    %552 = vmatpush1.bf16.msra.mxu0 0
    %553 = vmatprep.subr.bf16.mxu0 0
    %554 = vmatpush1.bf16.msra.mxu0 0
    %555 = vmatprep.subr.bf16.mxu0 0
    %556 = vmatpush1.bf16.msra.mxu0 0
    %557 = vmatprep.subr.bf16.mxu0 0
    %558 = vmatpush1.bf16.msra.mxu0 0
    %559 = vmatprep.subr.bf16.mxu0 0
    %560 = vmatpush1.bf16.msra.mxu0 0
    %561 = vmatprep.mubr.bf16.mxu0 0
    %562 = vmatmul.mubr.bf16.gmra.mrb[0].mxu0 %v518
    %v563 = vpop.f32.mrb[0].mxu0
    %v564 = vadd.f32 0.0, %v563
    %v565 = vpop.f32.mrb[0].mxu0
    %v566 = vpop.f32.mrb[0].mxu0
    %v567 = vadd.f32 0.0, %v566
    %v568 = vpop.f32.mrb[0].mxu0
    %569 = vmatprep.mubr.bf16.mxu0 0
    %570 = vmatmul.mubr.bf16.gmra.mrb[0].mxu0 %v521
    %v571 = vpop.f32.mrb[0].mxu0
    %v572 = vadd.f32 0.0, %v571
    %v573 = vpop.f32.mrb[0].mxu0
    %v574 = vpop.f32.mrb[0].mxu0
    %v575 = vadd.f32 0.0, %v574
    %v576 = vpop.f32.mrb[0].mxu0
    %577 = vmatprep.mubr.bf16.mxu0 0
    %578 = vmatmul.mubr.bf16.gmra.mrb[0].mxu0 %v524
    %v579 = vpop.f32.mrb[0].mxu0
    %v580 = vadd.f32 0.0, %v579
    %v581 = vpop.f32.mrb[0].mxu0
    %v582 = vpop.f32.mrb[0].mxu0
    %v583 = vadd.f32 0.0, %v582
    %v584 = vpop.f32.mrb[0].mxu0
    %585 = vmatprep.mubr.bf16.mxu0 0
    %586 = vmatmul.mubr.bf16.gmra.mrb[0].mxu0 %v527
    %v587 = vpop.f32.mrb[0].mxu0
    %v588 = vadd.f32 0.0, %v587
    %v589 = vpop.f32.mrb[0].mxu0
    %v590 = vpop.f32.mrb[0].mxu0
    %v591 = vadd.f32 0.0, %v590
    %v592 = vpop.f32.mrb[0].mxu0
    %593 = vdwg.mxu0
    %v594 = vpack.c.bf16 %v567, %v564
    %v595 = vpack.c.bf16 %v575, %v572
    %v596 = vpack.c.bf16 %v583, %v580
    %v597 = vpack.c.bf16 %v591, %v588
    %v599 = vlaneseq
    %v600 = vshrl.u32 %v599, 7
    %v601 = vsub.s32 0, %v600
    %v602 = vrot.slane %v43, %v601
    %v605 = vsel %vm98, %v37, 0
    %607 = vmatprep.subr.bf16.mxu0 0
    %608 = vmatpush1.bf16.xpose.msra.mxu0 %v605
    %609 = vmatprep.subr.bf16.mxu0 0
    %610 = vmatpush1.bf16.xpose.msra.mxu0 0
    %611 = vmatprep.subr.bf16.mxu0 0
    %612 = vmatpush1.bf16.xpose.msra.mxu0 0
    %613 = vmatprep.subr.bf16.mxu0 0
    %614 = vmatpush1.bf16.xpose.msra.mxu0 0
    %615 = vmatprep.subr.bf16.mxu0 0
    %616 = vmatpush1.bf16.xpose.msra.mxu0 0
    %617 = vmatprep.subr.bf16.mxu0 0
    %618 = vmatpush1.bf16.xpose.msra.mxu0 0
    %619 = vmatprep.subr.bf16.mxu0 0
    %620 = vmatpush1.bf16.xpose.msra.mxu0 0
    %621 = vmatprep.subr.bf16.mxu0 0
    %622 = vmatpush1.bf16.xpose.msra.mxu0 0
    %623 = vmatprep.subr.bf16.mxu0 0
    %624 = vmatpush1.bf16.xpose.msra.mxu0 0
    %625 = vmatprep.subr.bf16.mxu0 0
    %626 = vmatpush1.bf16.xpose.msra.mxu0 0
    %627 = vmatprep.subr.bf16.mxu0 0
    %628 = vmatpush1.bf16.xpose.msra.mxu0 0
    %629 = vmatprep.subr.bf16.mxu0 0
    %630 = vmatpush1.bf16.xpose.msra.mxu0 0
    %631 = vmatprep.subr.bf16.mxu0 0
    %632 = vmatpush1.bf16.xpose.msra.mxu0 0
    %633 = vmatprep.subr.bf16.mxu0 0
    %634 = vmatpush1.bf16.xpose.msra.mxu0 0
    %635 = vmatprep.subr.bf16.mxu0 0
    %636 = vmatpush1.bf16.xpose.msra.mxu0 0
    %637 = vmatprep.subr.bf16.mxu0 0
    %638 = vmatpush1.bf16.xpose.msra.mxu0 0
    %639 = vmatprep.mubr.bf16.mxu0 0
    %640 = vmatmul.mubr.bf16.gmra.mrb[0].mxu0 %v100
    %v641 = vpop.f32.mrb[0].mxu0
    %v642 = vadd.f32 %v602, %v641
    %v643 = vpop.f32.mrb[0].mxu0
    %v644 = vpop.f32.mrb[0].mxu0
    %v645 = vadd.f32 %v602, %v644
    %v646 = vpop.f32.mrb[0].mxu0
    %647 = vmatprep.mubr.bf16.mxu0 0
    %648 = vmatmul.mubr.bf16.gmra.mrb[0].mxu0 %v103
    %v649 = vpop.f32.mrb[0].mxu0
    %v650 = vadd.f32 %v602, %v649
    %v651 = vpop.f32.mrb[0].mxu0
    %v652 = vpop.f32.mrb[0].mxu0
    %v653 = vadd.f32 %v602, %v652
    %v654 = vpop.f32.mrb[0].mxu0
    %655 = vmatprep.mubr.bf16.mxu0 0
    %656 = vmatmul.mubr.bf16.gmra.mrb[0].mxu0 %v106
    %v657 = vpop.f32.mrb[0].mxu0
    %v658 = vadd.f32 %v602, %v657
    %v659 = vpop.f32.mrb[0].mxu0
    %v660 = vpop.f32.mrb[0].mxu0
    %v661 = vadd.f32 %v602, %v660
    %v662 = vpop.f32.mrb[0].mxu0
    %663 = vmatprep.mubr.bf16.mxu0 0
    %664 = vmatmul.mubr.bf16.gmra.mrb[0].mxu0 %v109
    %v665 = vpop.f32.mrb[0].mxu0
    %v666 = vadd.f32 %v602, %v665
    %v667 = vpop.f32.mrb[0].mxu0
    %v668 = vpop.f32.mrb[0].mxu0
    %v669 = vadd.f32 %v602, %v668
    %v670 = vpop.f32.mrb[0].mxu0
    %671 = vdwg.mxu0
    %v672 = vmul.f32 %v642, 0.35355338
    %v673 = vmul.f32 %v645, 0.35355338
    %v674 = vmul.f32 %v650, 0.35355338
    %v675 = vmul.f32 %v653, 0.35355338
    %v676 = vmul.f32 %v658, 0.35355338
    %v677 = vmul.f32 %v661, 0.35355338
    %v678 = vmul.f32 %v666, 0.35355338
    %v679 = vmul.f32 %v669, 0.35355338
    %v680 = vpack.c.bf16 %v673, %v672
    %v681 = vpack.c.bf16 %v675, %v674
    %v682 = vpack.c.bf16 %v677, %v676
    %v683 = vpack.c.bf16 %v679, %v678
    %v685 = vlaneseq
    %v686 = vshrl.u32 %v685, 7
    %v687 = vsub.s32 0, %v686
    %v688 = vrot.slane %v45, %v687
    %v691 = vsel %vm98, %v39, 0
    %693 = vmatprep.subr.bf16.mxu0 0
    %694 = vmatpush1.bf16.xpose.msra.mxu0 %v691
    %695 = vmatprep.subr.bf16.mxu0 0
    %696 = vmatpush1.bf16.xpose.msra.mxu0 0
    %697 = vmatprep.subr.bf16.mxu0 0
    %698 = vmatpush1.bf16.xpose.msra.mxu0 0
    %699 = vmatprep.subr.bf16.mxu0 0
    %700 = vmatpush1.bf16.xpose.msra.mxu0 0
    %701 = vmatprep.subr.bf16.mxu0 0
    %702 = vmatpush1.bf16.xpose.msra.mxu0 0
    %703 = vmatprep.subr.bf16.mxu0 0
    %704 = vmatpush1.bf16.xpose.msra.mxu0 0
    %705 = vmatprep.subr.bf16.mxu0 0
    %706 = vmatpush1.bf16.xpose.msra.mxu0 0
    %707 = vmatprep.subr.bf16.mxu0 0
    %708 = vmatpush1.bf16.xpose.msra.mxu0 0
    %709 = vmatprep.subr.bf16.mxu0 0
    %710 = vmatpush1.bf16.xpose.msra.mxu0 0
    %711 = vmatprep.subr.bf16.mxu0 0
    %712 = vmatpush1.bf16.xpose.msra.mxu0 0
    %713 = vmatprep.subr.bf16.mxu0 0
    %714 = vmatpush1.bf16.xpose.msra.mxu0 0
    %715 = vmatprep.subr.bf16.mxu0 0
    %716 = vmatpush1.bf16.xpose.msra.mxu0 0
    %717 = vmatprep.subr.bf16.mxu0 0
    %718 = vmatpush1.bf16.xpose.msra.mxu0 0
    %719 = vmatprep.subr.bf16.mxu0 0
    %720 = vmatpush1.bf16.xpose.msra.mxu0 0
    %721 = vmatprep.subr.bf16.mxu0 0
    %722 = vmatpush1.bf16.xpose.msra.mxu0 0
    %723 = vmatprep.subr.bf16.mxu0 0
    %724 = vmatpush1.bf16.xpose.msra.mxu0 0
    %725 = vmatprep.mubr.bf16.mxu0 0
    %726 = vmatmul.mubr.bf16.gmra.mrb[0].mxu0 %v100
    %v727 = vpop.f32.mrb[0].mxu0
    %v728 = vadd.f32 %v688, %v727
    %v729 = vpop.f32.mrb[0].mxu0
    %v730 = vpop.f32.mrb[0].mxu0
    %v731 = vadd.f32 %v688, %v730
    %v732 = vpop.f32.mrb[0].mxu0
    %733 = vmatprep.mubr.bf16.mxu0 0
    %734 = vmatmul.mubr.bf16.gmra.mrb[0].mxu0 %v103
    %v735 = vpop.f32.mrb[0].mxu0
    %v736 = vadd.f32 %v688, %v735
    %v737 = vpop.f32.mrb[0].mxu0
    %v738 = vpop.f32.mrb[0].mxu0
    %v739 = vadd.f32 %v688, %v738
    %v740 = vpop.f32.mrb[0].mxu0
    %741 = vmatprep.mubr.bf16.mxu0 0
    %742 = vmatmul.mubr.bf16.gmra.mrb[0].mxu0 %v106
    %v743 = vpop.f32.mrb[0].mxu0
    %v744 = vadd.f32 %v688, %v743
    %v745 = vpop.f32.mrb[0].mxu0
    %v746 = vpop.f32.mrb[0].mxu0
    %v747 = vadd.f32 %v688, %v746
    %v748 = vpop.f32.mrb[0].mxu0
    %749 = vmatprep.mubr.bf16.mxu0 0
    %750 = vmatmul.mubr.bf16.gmra.mrb[0].mxu0 %v109
    %v751 = vpop.f32.mrb[0].mxu0
    %v752 = vadd.f32 %v688, %v751
    %v753 = vpop.f32.mrb[0].mxu0
    %v754 = vpop.f32.mrb[0].mxu0
    %v755 = vadd.f32 %v688, %v754
    %v756 = vpop.f32.mrb[0].mxu0
    %757 = vdwg.mxu0
    %v758 = vpack.c.bf16 %v731, %v728
    %v759 = vpack.c.bf16 %v739, %v736
    %v760 = vpack.c.bf16 %v747, %v744
    %v761 = vpack.c.bf16 %v755, %v752
    %v763 = vlaneseq
    %v764 = vshrl.u32 %v763, 7
    %v765 = vsub.s32 0, %v764
    %v766 = vrot.slane %v47, %v765
    %v769 = vsel %vm98, %v41, 0
    %771 = vmatprep.subr.bf16.mxu0 0
    %772 = vmatpush1.bf16.xpose.msra.mxu0 %v769
    %773 = vmatprep.subr.bf16.mxu0 0
    %774 = vmatpush1.bf16.xpose.msra.mxu0 0
    %775 = vmatprep.subr.bf16.mxu0 0
    %776 = vmatpush1.bf16.xpose.msra.mxu0 0
    %777 = vmatprep.subr.bf16.mxu0 0
    %778 = vmatpush1.bf16.xpose.msra.mxu0 0
    %779 = vmatprep.subr.bf16.mxu0 0
    %780 = vmatpush1.bf16.xpose.msra.mxu0 0
    %781 = vmatprep.subr.bf16.mxu0 0
    %782 = vmatpush1.bf16.xpose.msra.mxu0 0
    %783 = vmatprep.subr.bf16.mxu0 0
    %784 = vmatpush1.bf16.xpose.msra.mxu0 0
    %785 = vmatprep.subr.bf16.mxu0 0
    %786 = vmatpush1.bf16.xpose.msra.mxu0 0
    %787 = vmatprep.subr.bf16.mxu0 0
    %788 = vmatpush1.bf16.xpose.msra.mxu0 0
    %789 = vmatprep.subr.bf16.mxu0 0
    %790 = vmatpush1.bf16.xpose.msra.mxu0 0
    %791 = vmatprep.subr.bf16.mxu0 0
    %792 = vmatpush1.bf16.xpose.msra.mxu0 0
    %793 = vmatprep.subr.bf16.mxu0 0
    %794 = vmatpush1.bf16.xpose.msra.mxu0 0
    %795 = vmatprep.subr.bf16.mxu0 0
    %796 = vmatpush1.bf16.xpose.msra.mxu0 0
    %797 = vmatprep.subr.bf16.mxu0 0
    %798 = vmatpush1.bf16.xpose.msra.mxu0 0
    %799 = vmatprep.subr.bf16.mxu0 0
    %800 = vmatpush1.bf16.xpose.msra.mxu0 0
    %801 = vmatprep.subr.bf16.mxu0 0
    %802 = vmatpush1.bf16.xpose.msra.mxu0 0
    %803 = vmatprep.mubr.bf16.mxu0 0
    %804 = vmatmul.mubr.bf16.gmra.mrb[0].mxu0 %v100
    %v805 = vpop.f32.mrb[0].mxu0
    %v806 = vadd.f32 %v766, %v805
    %v807 = vpop.f32.mrb[0].mxu0
    %v808 = vpop.f32.mrb[0].mxu0
    %v809 = vadd.f32 %v766, %v808
    %v810 = vpop.f32.mrb[0].mxu0
    %811 = vmatprep.mubr.bf16.mxu0 0
    %812 = vmatmul.mubr.bf16.gmra.mrb[0].mxu0 %v103
    %v813 = vpop.f32.mrb[0].mxu0
    %v814 = vadd.f32 %v766, %v813
    %v815 = vpop.f32.mrb[0].mxu0
    %v816 = vpop.f32.mrb[0].mxu0
    %v817 = vadd.f32 %v766, %v816
    %v818 = vpop.f32.mrb[0].mxu0
    %819 = vmatprep.mubr.bf16.mxu0 0
    %820 = vmatmul.mubr.bf16.gmra.mrb[0].mxu0 %v106
    %v821 = vpop.f32.mrb[0].mxu0
    %v822 = vadd.f32 %v766, %v821
    %v823 = vpop.f32.mrb[0].mxu0
    %v824 = vpop.f32.mrb[0].mxu0
    %v825 = vadd.f32 %v766, %v824
    %v826 = vpop.f32.mrb[0].mxu0
    %827 = vmatprep.mubr.bf16.mxu0 0
    %828 = vmatmul.mubr.bf16.gmra.mrb[0].mxu0 %v109
    %v829 = vpop.f32.mrb[0].mxu0
    %v830 = vadd.f32 %v766, %v829
    %v831 = vpop.f32.mrb[0].mxu0
    %v832 = vpop.f32.mrb[0].mxu0
    %v833 = vadd.f32 %v766, %v832
    %v834 = vpop.f32.mrb[0].mxu0
    %835 = vdwg.mxu0
    %v836 = vpack.c.bf16 %v809, %v806
    %v837 = vpack.c.bf16 %v817, %v814
    %v838 = vpack.c.bf16 %v825, %v822
    %v839 = vpack.c.bf16 %v833, %v830
    %v841 = vsel %vm347, %v680, 0
    %v844 = vsel %vm347, %v681, 0
    %v847 = vsel %vm347, %v682, 0
    %v850 = vsel %vm347, %v683, 0
    %v853 = vsel %vm347, %v758, 0
    %v856 = vsel %vm347, %v759, 0
    %v859 = vsel %vm347, %v760, 0
    %v862 = vsel %vm347, %v761, 0
    %864 = vmatprep.subr.bf16.mxu0 0
    %865 = vmatpush1.bf16.xpose.msra.mxu0 %v853
    %866 = vmatprep.subr.bf16.mxu0 0
    %867 = vmatpush1.bf16.xpose.msra.mxu0 %v856
    %868 = vmatprep.subr.bf16.mxu0 0
    %869 = vmatpush1.bf16.xpose.msra.mxu0 %v859
    %870 = vmatprep.subr.bf16.mxu0 0
    %871 = vmatpush1.bf16.xpose.msra.mxu0 %v862
    %872 = vmatprep.subr.bf16.mxu0 0
    %873 = vmatpush1.bf16.xpose.msra.mxu0 0
    %874 = vmatprep.subr.bf16.mxu0 0
    %875 = vmatpush1.bf16.xpose.msra.mxu0 0
    %876 = vmatprep.subr.bf16.mxu0 0
    %877 = vmatpush1.bf16.xpose.msra.mxu0 0
    %878 = vmatprep.subr.bf16.mxu0 0
    %879 = vmatpush1.bf16.xpose.msra.mxu0 0
    %880 = vmatprep.subr.bf16.mxu0 0
    %881 = vmatpush1.bf16.xpose.msra.mxu0 0
    %882 = vmatprep.subr.bf16.mxu0 0
    %883 = vmatpush1.bf16.xpose.msra.mxu0 0
    %884 = vmatprep.subr.bf16.mxu0 0
    %885 = vmatpush1.bf16.xpose.msra.mxu0 0
    %886 = vmatprep.subr.bf16.mxu0 0
    %887 = vmatpush1.bf16.xpose.msra.mxu0 0
    %888 = vmatprep.subr.bf16.mxu0 0
    %889 = vmatpush1.bf16.xpose.msra.mxu0 0
    %890 = vmatprep.subr.bf16.mxu0 0
    %891 = vmatpush1.bf16.xpose.msra.mxu0 0
    %892 = vmatprep.subr.bf16.mxu0 0
    %893 = vmatpush1.bf16.xpose.msra.mxu0 0
    %894 = vmatprep.subr.bf16.mxu0 0
    %895 = vmatpush1.bf16.xpose.msra.mxu0 0
    %896 = vmatprep.mubr.bf16.mxu0 0
    %897 = vmatmul.mubr.bf16.gmra.mrb[0].mxu0 %v841
    %v898 = vpop.f32.mrb[0].mxu0
    %v899 = vadd.f32 0.0, %v898
    %v900 = vpop.f32.mrb[0].mxu0
    %v901 = vpop.f32.mrb[0].mxu0
    %v902 = vadd.f32 0.0, %v901
    %v903 = vpop.f32.mrb[0].mxu0
    %904 = vmatprep.mubr.bf16.mxu0 0
    %905 = vmatmul.mubr.bf16.gmra.mrb[0].mxu0 %v844
    %v906 = vpop.f32.mrb[0].mxu0
    %v907 = vadd.f32 0.0, %v906
    %v908 = vpop.f32.mrb[0].mxu0
    %v909 = vpop.f32.mrb[0].mxu0
    %v910 = vadd.f32 0.0, %v909
    %v911 = vpop.f32.mrb[0].mxu0
    %912 = vmatprep.mubr.bf16.mxu0 0
    %913 = vmatmul.mubr.bf16.gmra.mrb[0].mxu0 %v847
    %v914 = vpop.f32.mrb[0].mxu0
    %v915 = vadd.f32 0.0, %v914
    %v916 = vpop.f32.mrb[0].mxu0
    %v917 = vpop.f32.mrb[0].mxu0
    %v918 = vadd.f32 0.0, %v917
    %v919 = vpop.f32.mrb[0].mxu0
    %920 = vmatprep.mubr.bf16.mxu0 0
    %921 = vmatmul.mubr.bf16.gmra.mrb[0].mxu0 %v850
    %v922 = vpop.f32.mrb[0].mxu0
    %v923 = vadd.f32 0.0, %v922
    %v924 = vpop.f32.mrb[0].mxu0
    %v925 = vpop.f32.mrb[0].mxu0
    %v926 = vadd.f32 0.0, %v925
    %v927 = vpop.f32.mrb[0].mxu0
    %928 = vdwg.mxu0
    %v929 = vsel %vm437, %v899, -inf
    %v930 = vsel %vm437, %v902, -inf
    %v931 = vsel %vm437, %v907, -inf
    %v932 = vsel %vm437, %v910, -inf
    %v933 = vsel %vm437, %v915, -inf
    %v934 = vmax.f32 %v929, %v933
    %v935 = vsel %vm437, %v918, -inf
    %v936 = vmax.f32 %v930, %v935
    %v937 = vsel %vm437, %v923, -inf
    %v938 = vmax.f32 %v931, %v937
    %v939 = vsel %vm437, %v926, -inf
    %v940 = vmax.f32 %v932, %v939
    %v941 = vmax.f32 %v934, %v936
    %v942 = vmax.f32 %v938, %v940
    %v943 = vmax.f32 %v941, %v942
    %v944 = vrot.slane %v943, 4
    %v945 = vmax.f32 %v943, %v944
    %v946 = vrot.slane %v945, 2
    %v947 = vmax.f32 %v945, %v946
    %v948 = vrot.slane %v947, 1
    %v949 = vmax.f32 %v947, %v948
    %v950 = vsub.f32 %v899, %v949
    %v951 = vsub.f32 %v902, %v949
    %v952 = vsub.f32 %v907, %v949
    %v953 = vsub.f32 %v910, %v949
    %v954 = vsub.f32 %v915, %v949
    %v955 = vsub.f32 %v918, %v949
    %v956 = vsub.f32 %v923, %v949
    %v957 = vsub.f32 %v926, %v949
    %v958 = vmul.f32 %v950, 1.442695
    %v959 = vpow.pop %v958
    %v960 = vmul.f32 %v951, 1.442695
    %v961 = vpow.pop %v960
    %v962 = vmul.f32 %v952, 1.442695
    %v963 = vpow.pop %v962
    %v964 = vmul.f32 %v953, 1.442695
    %v965 = vpow.pop %v964
    %v966 = vmul.f32 %v954, 1.442695
    %v967 = vpow.pop %v966
    %v968 = vmul.f32 %v955, 1.442695
    %v969 = vpow.pop %v968
    %v970 = vmul.f32 %v956, 1.442695
    %v971 = vpow.pop %v970
    %v972 = vmul.f32 %v957, 1.442695
    %v973 = vpow.pop %v972
    %v974 = vsel %vm437, %v959, 0.0
    %v975 = vsel %vm437, %v961, 0.0
    %v976 = vadd.f32 %v974, %v975
    %v977 = vsel %vm437, %v963, 0.0
    %v978 = vadd.f32 %v976, %v977
    %v979 = vsel %vm437, %v965, 0.0
    %v980 = vadd.f32 %v978, %v979
    %v981 = vsel %vm437, %v967, 0.0
    %v982 = vadd.f32 %v980, %v981
    %v983 = vsel %vm437, %v969, 0.0
    %v984 = vadd.f32 %v982, %v983
    %v985 = vsel %vm437, %v971, 0.0
    %v986 = vadd.f32 %v984, %v985
    %v987 = vsel %vm437, %v973, 0.0
    %v988 = vadd.f32 %v986, %v987
    %v989 = vrot.slane %v988, 4
    %v990 = vadd.f32 %v988, %v989
    %v991 = vrot.slane %v990, 2
    %v992 = vadd.f32 %v990, %v991
    %v993 = vrot.slane %v992, 1
    %v994 = vadd.f32 %v992, %v993
    %v995 = vrcp.pop %v994
    %v996 = vmul.f32 %v959, %v995
    %v997 = vmul.f32 %v961, %v995
    %v998 = vmul.f32 %v963, %v995
    %v999 = vmul.f32 %v965, %v995
    %v1000 = vmul.f32 %v967, %v995
    %v1001 = vmul.f32 %v969, %v995
    %v1002 = vmul.f32 %v971, %v995
    %v1003 = vmul.f32 %v973, %v995
    %v1004 = vpack.c.bf16 %v997, %v996
    %v1005 = vpack.c.bf16 %v999, %v998
    %v1006 = vpack.c.bf16 %v1001, %v1000
    %v1007 = vpack.c.bf16 %v1003, %v1002
    %v1009 = vsel %vm437, %v1004, 0
    %v1012 = vsel %vm437, %v1005, 0
    %v1015 = vsel %vm437, %v1006, 0
    %v1018 = vsel %vm437, %v1007, 0
    %1020 = vmatprep.subr.bf16.mxu0 0
    %1021 = vmatpush1.bf16.msra.mxu0 %v836
    %1022 = vmatprep.subr.bf16.mxu0 0
    %1023 = vmatpush1.bf16.msra.mxu0 %v837
    %1024 = vmatprep.subr.bf16.mxu0 0
    %1025 = vmatpush1.bf16.msra.mxu0 %v838
    %1026 = vmatprep.subr.bf16.mxu0 0
    %1027 = vmatpush1.bf16.msra.mxu0 %v839
    %1028 = vmatprep.subr.bf16.mxu0 0
    %1029 = vmatpush1.bf16.msra.mxu0 0
    %1030 = vmatprep.subr.bf16.mxu0 0
    %1031 = vmatpush1.bf16.msra.mxu0 0
    %1032 = vmatprep.subr.bf16.mxu0 0
    %1033 = vmatpush1.bf16.msra.mxu0 0
    %1034 = vmatprep.subr.bf16.mxu0 0
    %1035 = vmatpush1.bf16.msra.mxu0 0
    %1036 = vmatprep.subr.bf16.mxu0 0
    %1037 = vmatpush1.bf16.msra.mxu0 0
    %1038 = vmatprep.subr.bf16.mxu0 0
    %1039 = vmatpush1.bf16.msra.mxu0 0
    %1040 = vmatprep.subr.bf16.mxu0 0
    %1041 = vmatpush1.bf16.msra.mxu0 0
    %1042 = vmatprep.subr.bf16.mxu0 0
    %1043 = vmatpush1.bf16.msra.mxu0 0
    %1044 = vmatprep.subr.bf16.mxu0 0
    %1045 = vmatpush1.bf16.msra.mxu0 0
    %1046 = vmatprep.subr.bf16.mxu0 0
    %1047 = vmatpush1.bf16.msra.mxu0 0
    %1048 = vmatprep.subr.bf16.mxu0 0
    %1049 = vmatpush1.bf16.msra.mxu0 0
    %1050 = vmatprep.subr.bf16.mxu0 0
    %1051 = vmatpush1.bf16.msra.mxu0 0
    %1052 = vmatprep.mubr.bf16.mxu0 0
    %1053 = vmatmul.mubr.bf16.gmra.mrb[0].mxu0 %v1009
    %v1054 = vpop.f32.mrb[0].mxu0
    %v1055 = vadd.f32 0.0, %v1054
    %v1056 = vpop.f32.mrb[0].mxu0
    %v1057 = vpop.f32.mrb[0].mxu0
    %v1058 = vadd.f32 0.0, %v1057
    %v1059 = vpop.f32.mrb[0].mxu0
    %1060 = vmatprep.mubr.bf16.mxu0 0
    %1061 = vmatmul.mubr.bf16.gmra.mrb[0].mxu0 %v1012
    %v1062 = vpop.f32.mrb[0].mxu0
    %v1063 = vadd.f32 0.0, %v1062
    %v1064 = vpop.f32.mrb[0].mxu0
    %v1065 = vpop.f32.mrb[0].mxu0
    %v1066 = vadd.f32 0.0, %v1065
    %v1067 = vpop.f32.mrb[0].mxu0
    %1068 = vmatprep.mubr.bf16.mxu0 0
    %1069 = vmatmul.mubr.bf16.gmra.mrb[0].mxu0 %v1015
    %v1070 = vpop.f32.mrb[0].mxu0
    %v1071 = vadd.f32 0.0, %v1070
    %v1072 = vpop.f32.mrb[0].mxu0
    %v1073 = vpop.f32.mrb[0].mxu0
    %v1074 = vadd.f32 0.0, %v1073
    %v1075 = vpop.f32.mrb[0].mxu0
    %1076 = vmatprep.mubr.bf16.mxu0 0
    %1077 = vmatmul.mubr.bf16.gmra.mrb[0].mxu0 %v1018
    %v1078 = vpop.f32.mrb[0].mxu0
    %v1079 = vadd.f32 0.0, %v1078
    %v1080 = vpop.f32.mrb[0].mxu0
    %v1081 = vpop.f32.mrb[0].mxu0
    %v1082 = vadd.f32 0.0, %v1081
    %v1083 = vpop.f32.mrb[0].mxu0
    %1084 = vdwg.mxu0
    %v1085 = vpack.c.bf16 %v1058, %v1055
    %v1086 = vpack.c.bf16 %v1066, %v1063
    %v1087 = vpack.c.bf16 %v1074, %v1071
    %v1088 = vpack.c.bf16 %v1082, %v1079
    %v1091 = vunpack.c.l.b16 %v50
    %v1092 = vunpack.c.l.b16 %v51
    %v1093 = vpack.c.b16 %v1092, %v1091
    %v1095 = vsel %vm347, %v1093, 0
    %v1098 = vsel %vm347, %v1085, 0
    %v1101 = vsel %vm347, %v1086, 0
    %v1104 = vsel %vm347, %v1087, 0
    %v1107 = vsel %vm347, %v1088, 0
    %1109 = vmatprep.subr.bf16.mxu0 0
    %1110 = vmatpush1.bf16.xpose.msra.mxu0 %v1098
    %1111 = vmatprep.subr.bf16.mxu0 0
    %1112 = vmatpush1.bf16.xpose.msra.mxu0 %v1101
    %1113 = vmatprep.subr.bf16.mxu0 0
    %1114 = vmatpush1.bf16.xpose.msra.mxu0 %v1104
    %1115 = vmatprep.subr.bf16.mxu0 0
    %1116 = vmatpush1.bf16.xpose.msra.mxu0 %v1107
    %1117 = vmatprep.subr.bf16.mxu0 0
    %1118 = vmatpush1.bf16.xpose.msra.mxu0 0
    %1119 = vmatprep.subr.bf16.mxu0 0
    %1120 = vmatpush1.bf16.xpose.msra.mxu0 0
    %1121 = vmatprep.subr.bf16.mxu0 0
    %1122 = vmatpush1.bf16.xpose.msra.mxu0 0
    %1123 = vmatprep.subr.bf16.mxu0 0
    %1124 = vmatpush1.bf16.xpose.msra.mxu0 0
    %1125 = vmatprep.subr.bf16.mxu0 0
    %1126 = vmatpush1.bf16.xpose.msra.mxu0 0
    %1127 = vmatprep.subr.bf16.mxu0 0
    %1128 = vmatpush1.bf16.xpose.msra.mxu0 0
    %1129 = vmatprep.subr.bf16.mxu0 0
    %1130 = vmatpush1.bf16.xpose.msra.mxu0 0
    %1131 = vmatprep.subr.bf16.mxu0 0
    %1132 = vmatpush1.bf16.xpose.msra.mxu0 0
    %1133 = vmatprep.subr.bf16.mxu0 0
    %1134 = vmatpush1.bf16.xpose.msra.mxu0 0
    %1135 = vmatprep.subr.bf16.mxu0 0
    %1136 = vmatpush1.bf16.xpose.msra.mxu0 0
    %1137 = vmatprep.subr.bf16.mxu0 0
    %1138 = vmatpush1.bf16.xpose.msra.mxu0 0
    %1139 = vmatprep.subr.bf16.mxu0 0
    %1140 = vmatpush1.bf16.xpose.msra.mxu0 0
    %1141 = vmatprep.mubr.bf16.mxu0 0
    %1142 = vmatmul.mubr.bf16.gmra.mrb[0].mxu0 %v1095
    %v1143 = vpop.f32.mrb[0].mxu0
    %v1144 = vadd.f32 0.0, %v1143
    %v1145 = vpop.f32.mrb[0].mxu0
    %v1146 = vpop.f32.mrb[0].mxu0
    %v1147 = vadd.f32 0.0, %v1146
    %v1148 = vpop.f32.mrb[0].mxu0
    %1149 = vdwg.mxu0
    %v1152 = vunpack.c.l.b16 %v48
    %v1153 = vunpack.c.l.b16 %v49
    %v1154 = vpack.c.b16 %v1153, %v1152
    %v1156 = vsel %vm347, %v1154, 0
    %v1159 = vsel %vm347, %v594, 0
    %v1162 = vsel %vm347, %v595, 0
    %v1165 = vsel %vm347, %v596, 0
    %v1168 = vsel %vm347, %v597, 0
    %1170 = vmatprep.subr.bf16.mxu0 0
    %1171 = vmatpush1.bf16.xpose.msra.mxu0 %v1159
    %1172 = vmatprep.subr.bf16.mxu0 0
    %1173 = vmatpush1.bf16.xpose.msra.mxu0 %v1162
    %1174 = vmatprep.subr.bf16.mxu0 0
    %1175 = vmatpush1.bf16.xpose.msra.mxu0 %v1165
    %1176 = vmatprep.subr.bf16.mxu0 0
    %1177 = vmatpush1.bf16.xpose.msra.mxu0 %v1168
    %1178 = vmatprep.subr.bf16.mxu0 0
    %1179 = vmatpush1.bf16.xpose.msra.mxu0 0
    %1180 = vmatprep.subr.bf16.mxu0 0
    %1181 = vmatpush1.bf16.xpose.msra.mxu0 0
    %1182 = vmatprep.subr.bf16.mxu0 0
    %1183 = vmatpush1.bf16.xpose.msra.mxu0 0
    %1184 = vmatprep.subr.bf16.mxu0 0
    %1185 = vmatpush1.bf16.xpose.msra.mxu0 0
    %1186 = vmatprep.subr.bf16.mxu0 0
    %1187 = vmatpush1.bf16.xpose.msra.mxu0 0
    %1188 = vmatprep.subr.bf16.mxu0 0
    %1189 = vmatpush1.bf16.xpose.msra.mxu0 0
    %1190 = vmatprep.subr.bf16.mxu0 0
    %1191 = vmatpush1.bf16.xpose.msra.mxu0 0
    %1192 = vmatprep.subr.bf16.mxu0 0
    %1193 = vmatpush1.bf16.xpose.msra.mxu0 0
    %1194 = vmatprep.subr.bf16.mxu0 0
    %1195 = vmatpush1.bf16.xpose.msra.mxu0 0
    %1196 = vmatprep.subr.bf16.mxu0 0
    %1197 = vmatpush1.bf16.xpose.msra.mxu0 0
    %1198 = vmatprep.subr.bf16.mxu0 0
    %1199 = vmatpush1.bf16.xpose.msra.mxu0 0
    %1200 = vmatprep.subr.bf16.mxu0 0
    %1201 = vmatpush1.bf16.xpose.msra.mxu0 0
    %1202 = vmatprep.mubr.bf16.mxu0 0
    %1203 = vmatmul.mubr.bf16.gmra.mrb[0].mxu0 %v1156
    %v1204 = vpop.f32.mrb[0].mxu0
    %v1205 = vadd.f32 %v1144, %v1204
    %v1206 = vpop.f32.mrb[0].mxu0
    %v1207 = vpop.f32.mrb[0].mxu0
    %v1208 = vadd.f32 %v1147, %v1207
    %v1209 = vpop.f32.mrb[0].mxu0
    %1210 = vdwg.mxu0
    %1212 = vset.pattern.permute.xlu0 0
    %1213 = vperm.xlu0 %1212, %v52
    %v1214 = vpop.permute.xlu0 %1213
    %1217 = vset.pattern.permute.xlu0 0
    %1218 = vperm.xlu0 %1217, %v53
    %v1219 = vpop.permute.xlu0 %1218
    %v1221 = vadd.f32 %v1205, %v1214
    %v1222 = vadd.f32 %v1208, %v1219
    %v1223 = vadd.f32 %v1221, %v54
    %v1224 = vadd.f32 %v1222, %v55
    %1225 = vst.msk [vmem:[#allocation5] sm:$0xff] %vm437, %v1223
    %1226 = vst.msk [vmem:[#allocation5 + $0x8] sm:$0xff] %vm437, %v1224
    %s1227 = scalar_lea.vmem %s0, 16
    %v1228 = vld [vmem:[%s1227] sm:$0xff]
    %v1229 = vld [vmem:[%s1227 + $0x8] sm:$0xff]
    %1230 = vxpose.xlu0.b32.start [1/16] %v1228, 128
    %1231 = vxpose.xlu0.b32.cont [2/16] %v1229, 128
    %1232 = vxpose.xlu0.b32.cont [3/16] 0.0, 128
    %1233 = vxpose.xlu0.b32.cont [4/16] 0.0, 128
    %1234 = vxpose.xlu0.b32.cont [5/16] 0.0, 128
    %1235 = vxpose.xlu0.b32.cont [6/16] 0.0, 128
    %1236 = vxpose.xlu0.b32.cont [7/16] 0.0, 128
    %1237 = vxpose.xlu0.b32.cont [8/16] 0.0, 128
    %1238 = vxpose.xlu0.b32.cont [9/16] 0.0, 128
    %1239 = vxpose.xlu0.b32.cont [10/16] 0.0, 128
    %1240 = vxpose.xlu0.b32.cont [11/16] 0.0, 128
    %1241 = vxpose.xlu0.b32.cont [12/16] 0.0, 128
    %1242 = vxpose.xlu0.b32.cont [13/16] 0.0, 128
    %1243 = vxpose.xlu0.b32.cont [14/16] 0.0, 128
    %1244 = vxpose.xlu0.b32.cont [15/16] 0.0, 128
    %1245 = vxpose.xlu0.b32.end [16/16] 0.0, 128
    %v1246 = vpop.trf.xlu0
    %v1247 = vpop.trf.xlu0
    %v1248 = vpop.trf.xlu0
    %v1249 = vpop.trf.xlu0
    %v1250 = vpop.trf.xlu0
    %v1251 = vpop.trf.xlu0
    %v1252 = vpop.trf.xlu0
    %v1253 = vpop.trf.xlu0
    %v1254 = vpop.trf.xlu0
    %v1255 = vpop.trf.xlu0
    %v1256 = vpop.trf.xlu0
    %v1257 = vpop.trf.xlu0
    %v1258 = vpop.trf.xlu0
    %v1259 = vpop.trf.xlu0
    %v1260 = vpop.trf.xlu0
    %v1261 = vpop.trf.xlu0
    %v1262 = vpack.c.bf16 %v1247, %v1246
    %v1263 = vpack.c.bf16 %v1249, %v1248
    %v1264 = vpack.c.bf16 %v1251, %v1250
    %v1265 = vpack.c.bf16 %v1253, %v1252
    %v1267 = vsel %vm98, %v1262, 0
    %v1270 = vsel %vm98, %v1263, 0
    %v1273 = vsel %vm98, %v1264, 0
    %v1276 = vsel %vm98, %v1265, 0
    %1278 = vmatprep.subr.bf16.mxu0 0
    %1279 = vmatpush1.bf16.xpose.msra.mxu0 %v112
    %1280 = vmatprep.subr.bf16.mxu0 0
    %1281 = vmatpush1.bf16.xpose.msra.mxu0 0
    %1282 = vmatprep.subr.bf16.mxu0 0
    %1283 = vmatpush1.bf16.xpose.msra.mxu0 0
    %1284 = vmatprep.subr.bf16.mxu0 0
    %1285 = vmatpush1.bf16.xpose.msra.mxu0 0
    %1286 = vmatprep.subr.bf16.mxu0 0
    %1287 = vmatpush1.bf16.xpose.msra.mxu0 0
    %1288 = vmatprep.subr.bf16.mxu0 0
    %1289 = vmatpush1.bf16.xpose.msra.mxu0 0
    %1290 = vmatprep.subr.bf16.mxu0 0
    %1291 = vmatpush1.bf16.xpose.msra.mxu0 0
    %1292 = vmatprep.subr.bf16.mxu0 0
    %1293 = vmatpush1.bf16.xpose.msra.mxu0 0
    %1294 = vmatprep.subr.bf16.mxu0 0
    %1295 = vmatpush1.bf16.xpose.msra.mxu0 0
    %1296 = vmatprep.subr.bf16.mxu0 0
    %1297 = vmatpush1.bf16.xpose.msra.mxu0 0
    %1298 = vmatprep.subr.bf16.mxu0 0
    %1299 = vmatpush1.bf16.xpose.msra.mxu0 0
    %1300 = vmatprep.subr.bf16.mxu0 0
    %1301 = vmatpush1.bf16.xpose.msra.mxu0 0
    %1302 = vmatprep.subr.bf16.mxu0 0
    %1303 = vmatpush1.bf16.xpose.msra.mxu0 0
    %1304 = vmatprep.subr.bf16.mxu0 0
    %1305 = vmatpush1.bf16.xpose.msra.mxu0 0
    %1306 = vmatprep.subr.bf16.mxu0 0
    %1307 = vmatpush1.bf16.xpose.msra.mxu0 0
    %1308 = vmatprep.subr.bf16.mxu0 0
    %1309 = vmatpush1.bf16.xpose.msra.mxu0 0
    %1310 = vmatprep.mubr.bf16.mxu0 0
    %1311 = vmatmul.mubr.bf16.gmra.mrb[0].mxu0 %v1267
    %v1312 = vpop.f32.mrb[0].mxu0
    %v1313 = vadd.f32 %v96, %v1312
    %v1314 = vpop.f32.mrb[0].mxu0
    %v1315 = vpop.f32.mrb[0].mxu0
    %v1316 = vadd.f32 %v96, %v1315
    %v1317 = vpop.f32.mrb[0].mxu0
    %1318 = vmatprep.mubr.bf16.mxu0 0
    %1319 = vmatmul.mubr.bf16.gmra.mrb[0].mxu0 %v1270
    %v1320 = vpop.f32.mrb[0].mxu0
    %v1321 = vadd.f32 %v96, %v1320
    %v1322 = vpop.f32.mrb[0].mxu0
    %v1323 = vpop.f32.mrb[0].mxu0
    %v1324 = vadd.f32 %v96, %v1323
    %v1325 = vpop.f32.mrb[0].mxu0
    %1326 = vmatprep.mubr.bf16.mxu0 0
    %1327 = vmatmul.mubr.bf16.gmra.mrb[0].mxu0 %v1273
    %v1328 = vpop.f32.mrb[0].mxu0
    %v1329 = vadd.f32 %v96, %v1328
    %v1330 = vpop.f32.mrb[0].mxu0
    %v1331 = vpop.f32.mrb[0].mxu0
    %v1332 = vadd.f32 %v96, %v1331
    %v1333 = vpop.f32.mrb[0].mxu0
    %1334 = vmatprep.mubr.bf16.mxu0 0
    %1335 = vmatmul.mubr.bf16.gmra.mrb[0].mxu0 %v1276
    %v1336 = vpop.f32.mrb[0].mxu0
    %v1337 = vadd.f32 %v96, %v1336
    %v1338 = vpop.f32.mrb[0].mxu0
    %v1339 = vpop.f32.mrb[0].mxu0
    %v1340 = vadd.f32 %v96, %v1339
    %v1341 = vpop.f32.mrb[0].mxu0
    %1342 = vdwg.mxu0
    %v1343 = vmul.f32 %v1313, 0.35355338
    %v1344 = vmul.f32 %v1316, 0.35355338
    %v1345 = vmul.f32 %v1321, 0.35355338
    %v1346 = vmul.f32 %v1324, 0.35355338
    %v1347 = vmul.f32 %v1329, 0.35355338
    %v1348 = vmul.f32 %v1332, 0.35355338
    %v1349 = vmul.f32 %v1337, 0.35355338
    %v1350 = vmul.f32 %v1340, 0.35355338
    %v1351 = vpack.c.bf16 %v1344, %v1343
    %v1352 = vpack.c.bf16 %v1346, %v1345
    %v1353 = vpack.c.bf16 %v1348, %v1347
    %v1354 = vpack.c.bf16 %v1350, %v1349
    %1355 = vmatprep.subr.bf16.mxu0 0
    %1356 = vmatpush1.bf16.xpose.msra.mxu0 %v198
    %1357 = vmatprep.subr.bf16.mxu0 0
    %1358 = vmatpush1.bf16.xpose.msra.mxu0 0
    %1359 = vmatprep.subr.bf16.mxu0 0
    %1360 = vmatpush1.bf16.xpose.msra.mxu0 0
    %1361 = vmatprep.subr.bf16.mxu0 0
    %1362 = vmatpush1.bf16.xpose.msra.mxu0 0
    %1363 = vmatprep.subr.bf16.mxu0 0
    %1364 = vmatpush1.bf16.xpose.msra.mxu0 0
    %1365 = vmatprep.subr.bf16.mxu0 0
    %1366 = vmatpush1.bf16.xpose.msra.mxu0 0
    %1367 = vmatprep.subr.bf16.mxu0 0
    %1368 = vmatpush1.bf16.xpose.msra.mxu0 0
    %1369 = vmatprep.subr.bf16.mxu0 0
    %1370 = vmatpush1.bf16.xpose.msra.mxu0 0
    %1371 = vmatprep.subr.bf16.mxu0 0
    %1372 = vmatpush1.bf16.xpose.msra.mxu0 0
    %1373 = vmatprep.subr.bf16.mxu0 0
    %1374 = vmatpush1.bf16.xpose.msra.mxu0 0
    %1375 = vmatprep.subr.bf16.mxu0 0
    %1376 = vmatpush1.bf16.xpose.msra.mxu0 0
    %1377 = vmatprep.subr.bf16.mxu0 0
    %1378 = vmatpush1.bf16.xpose.msra.mxu0 0
    %1379 = vmatprep.subr.bf16.mxu0 0
    %1380 = vmatpush1.bf16.xpose.msra.mxu0 0
    %1381 = vmatprep.subr.bf16.mxu0 0
    %1382 = vmatpush1.bf16.xpose.msra.mxu0 0
    %1383 = vmatprep.subr.bf16.mxu0 0
    %1384 = vmatpush1.bf16.xpose.msra.mxu0 0
    %1385 = vmatprep.subr.bf16.mxu0 0
    %1386 = vmatpush1.bf16.xpose.msra.mxu0 0
    %1387 = vmatprep.mubr.bf16.mxu0 0
    %1388 = vmatmul.mubr.bf16.gmra.mrb[0].mxu0 %v1267
    %v1389 = vpop.f32.mrb[0].mxu0
    %v1390 = vadd.f32 %v195, %v1389
    %v1391 = vpop.f32.mrb[0].mxu0
    %v1392 = vpop.f32.mrb[0].mxu0
    %v1393 = vadd.f32 %v195, %v1392
    %v1394 = vpop.f32.mrb[0].mxu0
    %1395 = vmatprep.mubr.bf16.mxu0 0
    %1396 = vmatmul.mubr.bf16.gmra.mrb[0].mxu0 %v1270
    %v1397 = vpop.f32.mrb[0].mxu0
    %v1398 = vadd.f32 %v195, %v1397
    %v1399 = vpop.f32.mrb[0].mxu0
    %v1400 = vpop.f32.mrb[0].mxu0
    %v1401 = vadd.f32 %v195, %v1400
    %v1402 = vpop.f32.mrb[0].mxu0
    %1403 = vmatprep.mubr.bf16.mxu0 0
    %1404 = vmatmul.mubr.bf16.gmra.mrb[0].mxu0 %v1273
    %v1405 = vpop.f32.mrb[0].mxu0
    %v1406 = vadd.f32 %v195, %v1405
    %v1407 = vpop.f32.mrb[0].mxu0
    %v1408 = vpop.f32.mrb[0].mxu0
    %v1409 = vadd.f32 %v195, %v1408
    %v1410 = vpop.f32.mrb[0].mxu0
    %1411 = vmatprep.mubr.bf16.mxu0 0
    %1412 = vmatmul.mubr.bf16.gmra.mrb[0].mxu0 %v1276
    %v1413 = vpop.f32.mrb[0].mxu0
    %v1414 = vadd.f32 %v195, %v1413
    %v1415 = vpop.f32.mrb[0].mxu0
    %v1416 = vpop.f32.mrb[0].mxu0
    %v1417 = vadd.f32 %v195, %v1416
    %v1418 = vpop.f32.mrb[0].mxu0
    %1419 = vdwg.mxu0
    %v1420 = vpack.c.bf16 %v1393, %v1390
    %v1421 = vpack.c.bf16 %v1401, %v1398
    %v1422 = vpack.c.bf16 %v1409, %v1406
    %v1423 = vpack.c.bf16 %v1417, %v1414
    %1424 = vmatprep.subr.bf16.mxu0 0
    %1425 = vmatpush1.bf16.xpose.msra.mxu0 %v276
    %1426 = vmatprep.subr.bf16.mxu0 0
    %1427 = vmatpush1.bf16.xpose.msra.mxu0 0
    %1428 = vmatprep.subr.bf16.mxu0 0
    %1429 = vmatpush1.bf16.xpose.msra.mxu0 0
    %1430 = vmatprep.subr.bf16.mxu0 0
    %1431 = vmatpush1.bf16.xpose.msra.mxu0 0
    %1432 = vmatprep.subr.bf16.mxu0 0
    %1433 = vmatpush1.bf16.xpose.msra.mxu0 0
    %1434 = vmatprep.subr.bf16.mxu0 0
    %1435 = vmatpush1.bf16.xpose.msra.mxu0 0
    %1436 = vmatprep.subr.bf16.mxu0 0
    %1437 = vmatpush1.bf16.xpose.msra.mxu0 0
    %1438 = vmatprep.subr.bf16.mxu0 0
    %1439 = vmatpush1.bf16.xpose.msra.mxu0 0
    %1440 = vmatprep.subr.bf16.mxu0 0
    %1441 = vmatpush1.bf16.xpose.msra.mxu0 0
    %1442 = vmatprep.subr.bf16.mxu0 0
    %1443 = vmatpush1.bf16.xpose.msra.mxu0 0
    %1444 = vmatprep.subr.bf16.mxu0 0
    %1445 = vmatpush1.bf16.xpose.msra.mxu0 0
    %1446 = vmatprep.subr.bf16.mxu0 0
    %1447 = vmatpush1.bf16.xpose.msra.mxu0 0
    %1448 = vmatprep.subr.bf16.mxu0 0
    %1449 = vmatpush1.bf16.xpose.msra.mxu0 0
    %1450 = vmatprep.subr.bf16.mxu0 0
    %1451 = vmatpush1.bf16.xpose.msra.mxu0 0
    %1452 = vmatprep.subr.bf16.mxu0 0
    %1453 = vmatpush1.bf16.xpose.msra.mxu0 0
    %1454 = vmatprep.subr.bf16.mxu0 0
    %1455 = vmatpush1.bf16.xpose.msra.mxu0 0
    %1456 = vmatprep.mubr.bf16.mxu0 0
    %1457 = vmatmul.mubr.bf16.gmra.mrb[0].mxu0 %v1267
    %v1458 = vpop.f32.mrb[0].mxu0
    %v1459 = vadd.f32 %v273, %v1458
    %v1460 = vpop.f32.mrb[0].mxu0
    %v1461 = vpop.f32.mrb[0].mxu0
    %v1462 = vadd.f32 %v273, %v1461
    %v1463 = vpop.f32.mrb[0].mxu0
    %1464 = vmatprep.mubr.bf16.mxu0 0
    %1465 = vmatmul.mubr.bf16.gmra.mrb[0].mxu0 %v1270
    %v1466 = vpop.f32.mrb[0].mxu0
    %v1467 = vadd.f32 %v273, %v1466
    %v1468 = vpop.f32.mrb[0].mxu0
    %v1469 = vpop.f32.mrb[0].mxu0
    %v1470 = vadd.f32 %v273, %v1469
    %v1471 = vpop.f32.mrb[0].mxu0
    %1472 = vmatprep.mubr.bf16.mxu0 0
    %1473 = vmatmul.mubr.bf16.gmra.mrb[0].mxu0 %v1273
    %v1474 = vpop.f32.mrb[0].mxu0
    %v1475 = vadd.f32 %v273, %v1474
    %v1476 = vpop.f32.mrb[0].mxu0
    %v1477 = vpop.f32.mrb[0].mxu0
    %v1478 = vadd.f32 %v273, %v1477
    %v1479 = vpop.f32.mrb[0].mxu0
    %1480 = vmatprep.mubr.bf16.mxu0 0
    %1481 = vmatmul.mubr.bf16.gmra.mrb[0].mxu0 %v1276
    %v1482 = vpop.f32.mrb[0].mxu0
    %v1483 = vadd.f32 %v273, %v1482
    %v1484 = vpop.f32.mrb[0].mxu0
    %v1485 = vpop.f32.mrb[0].mxu0
    %v1486 = vadd.f32 %v273, %v1485
    %v1487 = vpop.f32.mrb[0].mxu0
    %1488 = vdwg.mxu0
    %v1489 = vpack.c.bf16 %v1462, %v1459
    %v1490 = vpack.c.bf16 %v1470, %v1467
    %v1491 = vpack.c.bf16 %v1478, %v1475
    %v1492 = vpack.c.bf16 %v1486, %v1483
    %v1494 = vsel %vm347, %v1351, 0
    %v1497 = vsel %vm347, %v1352, 0
    %v1500 = vsel %vm347, %v1353, 0
    %v1503 = vsel %vm347, %v1354, 0
    %v1506 = vsel %vm347, %v1420, 0
    %v1509 = vsel %vm347, %v1421, 0
    %v1512 = vsel %vm347, %v1422, 0
    %v1515 = vsel %vm347, %v1423, 0
    %1517 = vmatprep.subr.bf16.mxu0 0
    %1518 = vmatpush1.bf16.xpose.msra.mxu0 %v1506
    %1519 = vmatprep.subr.bf16.mxu0 0
    %1520 = vmatpush1.bf16.xpose.msra.mxu0 %v1509
    %1521 = vmatprep.subr.bf16.mxu0 0
    %1522 = vmatpush1.bf16.xpose.msra.mxu0 %v1512
    %1523 = vmatprep.subr.bf16.mxu0 0
    %1524 = vmatpush1.bf16.xpose.msra.mxu0 %v1515
    %1525 = vmatprep.subr.bf16.mxu0 0
    %1526 = vmatpush1.bf16.xpose.msra.mxu0 0
    %1527 = vmatprep.subr.bf16.mxu0 0
    %1528 = vmatpush1.bf16.xpose.msra.mxu0 0
    %1529 = vmatprep.subr.bf16.mxu0 0
    %1530 = vmatpush1.bf16.xpose.msra.mxu0 0
    %1531 = vmatprep.subr.bf16.mxu0 0
    %1532 = vmatpush1.bf16.xpose.msra.mxu0 0
    %1533 = vmatprep.subr.bf16.mxu0 0
    %1534 = vmatpush1.bf16.xpose.msra.mxu0 0
    %1535 = vmatprep.subr.bf16.mxu0 0
    %1536 = vmatpush1.bf16.xpose.msra.mxu0 0
    %1537 = vmatprep.subr.bf16.mxu0 0
    %1538 = vmatpush1.bf16.xpose.msra.mxu0 0
    %1539 = vmatprep.subr.bf16.mxu0 0
    %1540 = vmatpush1.bf16.xpose.msra.mxu0 0
    %1541 = vmatprep.subr.bf16.mxu0 0
    %1542 = vmatpush1.bf16.xpose.msra.mxu0 0
    %1543 = vmatprep.subr.bf16.mxu0 0
    %1544 = vmatpush1.bf16.xpose.msra.mxu0 0
    %1545 = vmatprep.subr.bf16.mxu0 0
    %1546 = vmatpush1.bf16.xpose.msra.mxu0 0
    %1547 = vmatprep.subr.bf16.mxu0 0
    %1548 = vmatpush1.bf16.xpose.msra.mxu0 0
    %1549 = vmatprep.mubr.bf16.mxu0 0
    %1550 = vmatmul.mubr.bf16.gmra.mrb[0].mxu0 %v1494
    %v1551 = vpop.f32.mrb[0].mxu0
    %v1552 = vadd.f32 0.0, %v1551
    %v1553 = vpop.f32.mrb[0].mxu0
    %v1554 = vpop.f32.mrb[0].mxu0
    %v1555 = vadd.f32 0.0, %v1554
    %v1556 = vpop.f32.mrb[0].mxu0
    %1557 = vmatprep.mubr.bf16.mxu0 0
    %1558 = vmatmul.mubr.bf16.gmra.mrb[0].mxu0 %v1497
    %v1559 = vpop.f32.mrb[0].mxu0
    %v1560 = vadd.f32 0.0, %v1559
    %v1561 = vpop.f32.mrb[0].mxu0
    %v1562 = vpop.f32.mrb[0].mxu0
    %v1563 = vadd.f32 0.0, %v1562
    %v1564 = vpop.f32.mrb[0].mxu0
    %1565 = vmatprep.mubr.bf16.mxu0 0
    %1566 = vmatmul.mubr.bf16.gmra.mrb[0].mxu0 %v1500
    %v1567 = vpop.f32.mrb[0].mxu0
    %v1568 = vadd.f32 0.0, %v1567
    %v1569 = vpop.f32.mrb[0].mxu0
    %v1570 = vpop.f32.mrb[0].mxu0
    %v1571 = vadd.f32 0.0, %v1570
    %v1572 = vpop.f32.mrb[0].mxu0
    %1573 = vmatprep.mubr.bf16.mxu0 0
    %1574 = vmatmul.mubr.bf16.gmra.mrb[0].mxu0 %v1503
    %v1575 = vpop.f32.mrb[0].mxu0
    %v1576 = vadd.f32 0.0, %v1575
    %v1577 = vpop.f32.mrb[0].mxu0
    %v1578 = vpop.f32.mrb[0].mxu0
    %v1579 = vadd.f32 0.0, %v1578
    %v1580 = vpop.f32.mrb[0].mxu0
    %1581 = vdwg.mxu0
    %v1582 = vsel %vm437, %v1552, -inf
    %v1583 = vsel %vm437, %v1555, -inf
    %v1584 = vsel %vm437, %v1560, -inf
    %v1585 = vsel %vm437, %v1563, -inf
    %v1586 = vsel %vm437, %v1568, -inf
    %v1587 = vmax.f32 %v1582, %v1586
    %v1588 = vsel %vm437, %v1571, -inf
    %v1589 = vmax.f32 %v1583, %v1588
    %v1590 = vsel %vm437, %v1576, -inf
    %v1591 = vmax.f32 %v1584, %v1590
    %v1592 = vsel %vm437, %v1579, -inf
    %v1593 = vmax.f32 %v1585, %v1592
    %v1594 = vmax.f32 %v1587, %v1589
    %v1595 = vmax.f32 %v1591, %v1593
    %v1596 = vmax.f32 %v1594, %v1595
    %v1597 = vrot.slane %v1596, 4
    %v1598 = vmax.f32 %v1596, %v1597
    %v1599 = vrot.slane %v1598, 2
    %v1600 = vmax.f32 %v1598, %v1599
    %v1601 = vrot.slane %v1600, 1
    %v1602 = vmax.f32 %v1600, %v1601
    %v1603 = vsub.f32 %v1552, %v1602
    %v1604 = vsub.f32 %v1555, %v1602
    %v1605 = vsub.f32 %v1560, %v1602
    %v1606 = vsub.f32 %v1563, %v1602
    %v1607 = vsub.f32 %v1568, %v1602
    %v1608 = vsub.f32 %v1571, %v1602
    %v1609 = vsub.f32 %v1576, %v1602
    %v1610 = vsub.f32 %v1579, %v1602
    %v1611 = vmul.f32 %v1603, 1.442695
    %v1612 = vpow.pop %v1611
    %v1613 = vmul.f32 %v1604, 1.442695
    %v1614 = vpow.pop %v1613
    %v1615 = vmul.f32 %v1605, 1.442695
    %v1616 = vpow.pop %v1615
    %v1617 = vmul.f32 %v1606, 1.442695
    %v1618 = vpow.pop %v1617
    %v1619 = vmul.f32 %v1607, 1.442695
    %v1620 = vpow.pop %v1619
    %v1621 = vmul.f32 %v1608, 1.442695
    %v1622 = vpow.pop %v1621
    %v1623 = vmul.f32 %v1609, 1.442695
    %v1624 = vpow.pop %v1623
    %v1625 = vmul.f32 %v1610, 1.442695
    %v1626 = vpow.pop %v1625
    %v1627 = vsel %vm437, %v1612, 0.0
    %v1628 = vsel %vm437, %v1614, 0.0
    %v1629 = vadd.f32 %v1627, %v1628
    %v1630 = vsel %vm437, %v1616, 0.0
    %v1631 = vadd.f32 %v1629, %v1630
    %v1632 = vsel %vm437, %v1618, 0.0
    %v1633 = vadd.f32 %v1631, %v1632
    %v1634 = vsel %vm437, %v1620, 0.0
    %v1635 = vadd.f32 %v1633, %v1634
    %v1636 = vsel %vm437, %v1622, 0.0
    %v1637 = vadd.f32 %v1635, %v1636
    %v1638 = vsel %vm437, %v1624, 0.0
    %v1639 = vadd.f32 %v1637, %v1638
    %v1640 = vsel %vm437, %v1626, 0.0
    %v1641 = vadd.f32 %v1639, %v1640
    %v1642 = vrot.slane %v1641, 4
    %v1643 = vadd.f32 %v1641, %v1642
    %v1644 = vrot.slane %v1643, 2
    %v1645 = vadd.f32 %v1643, %v1644
    %v1646 = vrot.slane %v1645, 1
    %v1647 = vadd.f32 %v1645, %v1646
    %v1648 = vrcp.pop %v1647
    %v1649 = vmul.f32 %v1612, %v1648
    %v1650 = vmul.f32 %v1614, %v1648
    %v1651 = vmul.f32 %v1616, %v1648
    %v1652 = vmul.f32 %v1618, %v1648
    %v1653 = vmul.f32 %v1620, %v1648
    %v1654 = vmul.f32 %v1622, %v1648
    %v1655 = vmul.f32 %v1624, %v1648
    %v1656 = vmul.f32 %v1626, %v1648
    %v1657 = vpack.c.bf16 %v1650, %v1649
    %v1658 = vpack.c.bf16 %v1652, %v1651
    %v1659 = vpack.c.bf16 %v1654, %v1653
    %v1660 = vpack.c.bf16 %v1656, %v1655
    %v1662 = vsel %vm437, %v1657, 0
    %v1665 = vsel %vm437, %v1658, 0
    %v1668 = vsel %vm437, %v1659, 0
    %v1671 = vsel %vm437, %v1660, 0
    %1673 = vmatprep.subr.bf16.mxu0 0
    %1674 = vmatpush1.bf16.msra.mxu0 %v1489
    %1675 = vmatprep.subr.bf16.mxu0 0
    %1676 = vmatpush1.bf16.msra.mxu0 %v1490
    %1677 = vmatprep.subr.bf16.mxu0 0
    %1678 = vmatpush1.bf16.msra.mxu0 %v1491
    %1679 = vmatprep.subr.bf16.mxu0 0
    %1680 = vmatpush1.bf16.msra.mxu0 %v1492
    %1681 = vmatprep.subr.bf16.mxu0 0
    %1682 = vmatpush1.bf16.msra.mxu0 0
    %1683 = vmatprep.subr.bf16.mxu0 0
    %1684 = vmatpush1.bf16.msra.mxu0 0
    %1685 = vmatprep.subr.bf16.mxu0 0
    %1686 = vmatpush1.bf16.msra.mxu0 0
    %1687 = vmatprep.subr.bf16.mxu0 0
    %1688 = vmatpush1.bf16.msra.mxu0 0
    %1689 = vmatprep.subr.bf16.mxu0 0
    %1690 = vmatpush1.bf16.msra.mxu0 0
    %1691 = vmatprep.subr.bf16.mxu0 0
    %1692 = vmatpush1.bf16.msra.mxu0 0
    %1693 = vmatprep.subr.bf16.mxu0 0
    %1694 = vmatpush1.bf16.msra.mxu0 0
    %1695 = vmatprep.subr.bf16.mxu0 0
    %1696 = vmatpush1.bf16.msra.mxu0 0
    %1697 = vmatprep.subr.bf16.mxu0 0
    %1698 = vmatpush1.bf16.msra.mxu0 0
    %1699 = vmatprep.subr.bf16.mxu0 0
    %1700 = vmatpush1.bf16.msra.mxu0 0
    %1701 = vmatprep.subr.bf16.mxu0 0
    %1702 = vmatpush1.bf16.msra.mxu0 0
    %1703 = vmatprep.subr.bf16.mxu0 0
    %1704 = vmatpush1.bf16.msra.mxu0 0
    %1705 = vmatprep.mubr.bf16.mxu0 0
    %1706 = vmatmul.mubr.bf16.gmra.mrb[0].mxu0 %v1662
    %v1707 = vpop.f32.mrb[0].mxu0
    %v1708 = vadd.f32 0.0, %v1707
    %v1709 = vpop.f32.mrb[0].mxu0
    %v1710 = vpop.f32.mrb[0].mxu0
    %v1711 = vadd.f32 0.0, %v1710
    %v1712 = vpop.f32.mrb[0].mxu0
    %1713 = vmatprep.mubr.bf16.mxu0 0
    %1714 = vmatmul.mubr.bf16.gmra.mrb[0].mxu0 %v1665
    %v1715 = vpop.f32.mrb[0].mxu0
    %v1716 = vadd.f32 0.0, %v1715
    %v1717 = vpop.f32.mrb[0].mxu0
    %v1718 = vpop.f32.mrb[0].mxu0
    %v1719 = vadd.f32 0.0, %v1718
    %v1720 = vpop.f32.mrb[0].mxu0
    %1721 = vmatprep.mubr.bf16.mxu0 0
    %1722 = vmatmul.mubr.bf16.gmra.mrb[0].mxu0 %v1668
    %v1723 = vpop.f32.mrb[0].mxu0
    %v1724 = vadd.f32 0.0, %v1723
    %v1725 = vpop.f32.mrb[0].mxu0
    %v1726 = vpop.f32.mrb[0].mxu0
    %v1727 = vadd.f32 0.0, %v1726
    %v1728 = vpop.f32.mrb[0].mxu0
    %1729 = vmatprep.mubr.bf16.mxu0 0
    %1730 = vmatmul.mubr.bf16.gmra.mrb[0].mxu0 %v1671
    %v1731 = vpop.f32.mrb[0].mxu0
    %v1732 = vadd.f32 0.0, %v1731
    %v1733 = vpop.f32.mrb[0].mxu0
    %v1734 = vpop.f32.mrb[0].mxu0
    %v1735 = vadd.f32 0.0, %v1734
    %v1736 = vpop.f32.mrb[0].mxu0
    %1737 = vdwg.mxu0
    %v1738 = vpack.c.bf16 %v1711, %v1708
    %v1739 = vpack.c.bf16 %v1719, %v1716
    %v1740 = vpack.c.bf16 %v1727, %v1724
    %v1741 = vpack.c.bf16 %v1735, %v1732
    %1742 = vmatprep.subr.bf16.mxu0 0
    %1743 = vmatpush1.bf16.xpose.msra.mxu0 %v605
    %1744 = vmatprep.subr.bf16.mxu0 0
    %1745 = vmatpush1.bf16.xpose.msra.mxu0 0
    %1746 = vmatprep.subr.bf16.mxu0 0
    %1747 = vmatpush1.bf16.xpose.msra.mxu0 0
    %1748 = vmatprep.subr.bf16.mxu0 0
    %1749 = vmatpush1.bf16.xpose.msra.mxu0 0
    %1750 = vmatprep.subr.bf16.mxu0 0
    %1751 = vmatpush1.bf16.xpose.msra.mxu0 0
    %1752 = vmatprep.subr.bf16.mxu0 0
    %1753 = vmatpush1.bf16.xpose.msra.mxu0 0
    %1754 = vmatprep.subr.bf16.mxu0 0
    %1755 = vmatpush1.bf16.xpose.msra.mxu0 0
    %1756 = vmatprep.subr.bf16.mxu0 0
    %1757 = vmatpush1.bf16.xpose.msra.mxu0 0
    %1758 = vmatprep.subr.bf16.mxu0 0
    %1759 = vmatpush1.bf16.xpose.msra.mxu0 0
    %1760 = vmatprep.subr.bf16.mxu0 0
    %1761 = vmatpush1.bf16.xpose.msra.mxu0 0
    %1762 = vmatprep.subr.bf16.mxu0 0
    %1763 = vmatpush1.bf16.xpose.msra.mxu0 0
    %1764 = vmatprep.subr.bf16.mxu0 0
    %1765 = vmatpush1.bf16.xpose.msra.mxu0 0
    %1766 = vmatprep.subr.bf16.mxu0 0
    %1767 = vmatpush1.bf16.xpose.msra.mxu0 0
    %1768 = vmatprep.subr.bf16.mxu0 0
    %1769 = vmatpush1.bf16.xpose.msra.mxu0 0
    %1770 = vmatprep.subr.bf16.mxu0 0
    %1771 = vmatpush1.bf16.xpose.msra.mxu0 0
    %1772 = vmatprep.subr.bf16.mxu0 0
    %1773 = vmatpush1.bf16.xpose.msra.mxu0 0
    %1774 = vmatprep.mubr.bf16.mxu0 0
    %1775 = vmatmul.mubr.bf16.gmra.mrb[0].mxu0 %v1267
    %v1776 = vpop.f32.mrb[0].mxu0
    %v1777 = vadd.f32 %v602, %v1776
    %v1778 = vpop.f32.mrb[0].mxu0
    %v1779 = vpop.f32.mrb[0].mxu0
    %v1780 = vadd.f32 %v602, %v1779
    %v1781 = vpop.f32.mrb[0].mxu0
    %1782 = vmatprep.mubr.bf16.mxu0 0
    %1783 = vmatmul.mubr.bf16.gmra.mrb[0].mxu0 %v1270
    %v1784 = vpop.f32.mrb[0].mxu0
    %v1785 = vadd.f32 %v602, %v1784
    %v1786 = vpop.f32.mrb[0].mxu0
    %v1787 = vpop.f32.mrb[0].mxu0
    %v1788 = vadd.f32 %v602, %v1787
    %v1789 = vpop.f32.mrb[0].mxu0
    %1790 = vmatprep.mubr.bf16.mxu0 0
    %1791 = vmatmul.mubr.bf16.gmra.mrb[0].mxu0 %v1273
    %v1792 = vpop.f32.mrb[0].mxu0
    %v1793 = vadd.f32 %v602, %v1792
    %v1794 = vpop.f32.mrb[0].mxu0
    %v1795 = vpop.f32.mrb[0].mxu0
    %v1796 = vadd.f32 %v602, %v1795
    %v1797 = vpop.f32.mrb[0].mxu0
    %1798 = vmatprep.mubr.bf16.mxu0 0
    %1799 = vmatmul.mubr.bf16.gmra.mrb[0].mxu0 %v1276
    %v1800 = vpop.f32.mrb[0].mxu0
    %v1801 = vadd.f32 %v602, %v1800
    %v1802 = vpop.f32.mrb[0].mxu0
    %v1803 = vpop.f32.mrb[0].mxu0
    %v1804 = vadd.f32 %v602, %v1803
    %v1805 = vpop.f32.mrb[0].mxu0
    %1806 = vdwg.mxu0
    %v1807 = vmul.f32 %v1777, 0.35355338
    %v1808 = vmul.f32 %v1780, 0.35355338
    %v1809 = vmul.f32 %v1785, 0.35355338
    %v1810 = vmul.f32 %v1788, 0.35355338
    %v1811 = vmul.f32 %v1793, 0.35355338
    %v1812 = vmul.f32 %v1796, 0.35355338
    %v1813 = vmul.f32 %v1801, 0.35355338
    %v1814 = vmul.f32 %v1804, 0.35355338
    %v1815 = vpack.c.bf16 %v1808, %v1807
    %v1816 = vpack.c.bf16 %v1810, %v1809
    %v1817 = vpack.c.bf16 %v1812, %v1811
    %v1818 = vpack.c.bf16 %v1814, %v1813
    %1819 = vmatprep.subr.bf16.mxu0 0
    %1820 = vmatpush1.bf16.xpose.msra.mxu0 %v691
    %1821 = vmatprep.subr.bf16.mxu0 0
    %1822 = vmatpush1.bf16.xpose.msra.mxu0 0
    %1823 = vmatprep.subr.bf16.mxu0 0
    %1824 = vmatpush1.bf16.xpose.msra.mxu0 0
    %1825 = vmatprep.subr.bf16.mxu0 0
    %1826 = vmatpush1.bf16.xpose.msra.mxu0 0
    %1827 = vmatprep.subr.bf16.mxu0 0
    %1828 = vmatpush1.bf16.xpose.msra.mxu0 0
    %1829 = vmatprep.subr.bf16.mxu0 0
    %1830 = vmatpush1.bf16.xpose.msra.mxu0 0
    %1831 = vmatprep.subr.bf16.mxu0 0
    %1832 = vmatpush1.bf16.xpose.msra.mxu0 0
    %1833 = vmatprep.subr.bf16.mxu0 0
    %1834 = vmatpush1.bf16.xpose.msra.mxu0 0
    %1835 = vmatprep.subr.bf16.mxu0 0
    %1836 = vmatpush1.bf16.xpose.msra.mxu0 0
    %1837 = vmatprep.subr.bf16.mxu0 0
    %1838 = vmatpush1.bf16.xpose.msra.mxu0 0
    %1839 = vmatprep.subr.bf16.mxu0 0
    %1840 = vmatpush1.bf16.xpose.msra.mxu0 0
    %1841 = vmatprep.subr.bf16.mxu0 0
    %1842 = vmatpush1.bf16.xpose.msra.mxu0 0
    %1843 = vmatprep.subr.bf16.mxu0 0
    %1844 = vmatpush1.bf16.xpose.msra.mxu0 0
    %1845 = vmatprep.subr.bf16.mxu0 0
    %1846 = vmatpush1.bf16.xpose.msra.mxu0 0
    %1847 = vmatprep.subr.bf16.mxu0 0
    %1848 = vmatpush1.bf16.xpose.msra.mxu0 0
    %1849 = vmatprep.subr.bf16.mxu0 0
    %1850 = vmatpush1.bf16.xpose.msra.mxu0 0
    %1851 = vmatprep.mubr.bf16.mxu0 0
    %1852 = vmatmul.mubr.bf16.gmra.mrb[0].mxu0 %v1267
    %v1853 = vpop.f32.mrb[0].mxu0
    %v1854 = vadd.f32 %v688, %v1853
    %v1855 = vpop.f32.mrb[0].mxu0
    %v1856 = vpop.f32.mrb[0].mxu0
    %v1857 = vadd.f32 %v688, %v1856
    %v1858 = vpop.f32.mrb[0].mxu0
    %1859 = vmatprep.mubr.bf16.mxu0 0
    %1860 = vmatmul.mubr.bf16.gmra.mrb[0].mxu0 %v1270
    %v1861 = vpop.f32.mrb[0].mxu0
    %v1862 = vadd.f32 %v688, %v1861
    %v1863 = vpop.f32.mrb[0].mxu0
    %v1864 = vpop.f32.mrb[0].mxu0
    %v1865 = vadd.f32 %v688, %v1864
    %v1866 = vpop.f32.mrb[0].mxu0
    %1867 = vmatprep.mubr.bf16.mxu0 0
    %1868 = vmatmul.mubr.bf16.gmra.mrb[0].mxu0 %v1273
    %v1869 = vpop.f32.mrb[0].mxu0
    %v1870 = vadd.f32 %v688, %v1869
    %v1871 = vpop.f32.mrb[0].mxu0
    %v1872 = vpop.f32.mrb[0].mxu0
    %v1873 = vadd.f32 %v688, %v1872
    %v1874 = vpop.f32.mrb[0].mxu0
    %1875 = vmatprep.mubr.bf16.mxu0 0
    %1876 = vmatmul.mubr.bf16.gmra.mrb[0].mxu0 %v1276
    %v1877 = vpop.f32.mrb[0].mxu0
    %v1878 = vadd.f32 %v688, %v1877
    %v1879 = vpop.f32.mrb[0].mxu0
    %v1880 = vpop.f32.mrb[0].mxu0
    %v1881 = vadd.f32 %v688, %v1880
    %v1882 = vpop.f32.mrb[0].mxu0
    %1883 = vdwg.mxu0
    %v1884 = vpack.c.bf16 %v1857, %v1854
    %v1885 = vpack.c.bf16 %v1865, %v1862
    %v1886 = vpack.c.bf16 %v1873, %v1870
    %v1887 = vpack.c.bf16 %v1881, %v1878
    %1888 = vmatprep.subr.bf16.mxu0 0
    %1889 = vmatpush1.bf16.xpose.msra.mxu0 %v769
    %1890 = vmatprep.subr.bf16.mxu0 0
    %1891 = vmatpush1.bf16.xpose.msra.mxu0 0
    %1892 = vmatprep.subr.bf16.mxu0 0
    %1893 = vmatpush1.bf16.xpose.msra.mxu0 0
    %1894 = vmatprep.subr.bf16.mxu0 0
    %1895 = vmatpush1.bf16.xpose.msra.mxu0 0
    %1896 = vmatprep.subr.bf16.mxu0 0
    %1897 = vmatpush1.bf16.xpose.msra.mxu0 0
    %1898 = vmatprep.subr.bf16.mxu0 0
    %1899 = vmatpush1.bf16.xpose.msra.mxu0 0
    %1900 = vmatprep.subr.bf16.mxu0 0
    %1901 = vmatpush1.bf16.xpose.msra.mxu0 0
    %1902 = vmatprep.subr.bf16.mxu0 0
    %1903 = vmatpush1.bf16.xpose.msra.mxu0 0
    %1904 = vmatprep.subr.bf16.mxu0 0
    %1905 = vmatpush1.bf16.xpose.msra.mxu0 0
    %1906 = vmatprep.subr.bf16.mxu0 0
    %1907 = vmatpush1.bf16.xpose.msra.mxu0 0
    %1908 = vmatprep.subr.bf16.mxu0 0
    %1909 = vmatpush1.bf16.xpose.msra.mxu0 0
    %1910 = vmatprep.subr.bf16.mxu0 0
    %1911 = vmatpush1.bf16.xpose.msra.mxu0 0
    %1912 = vmatprep.subr.bf16.mxu0 0
    %1913 = vmatpush1.bf16.xpose.msra.mxu0 0
    %1914 = vmatprep.subr.bf16.mxu0 0
    %1915 = vmatpush1.bf16.xpose.msra.mxu0 0
    %1916 = vmatprep.subr.bf16.mxu0 0
    %1917 = vmatpush1.bf16.xpose.msra.mxu0 0
    %1918 = vmatprep.subr.bf16.mxu0 0
    %1919 = vmatpush1.bf16.xpose.msra.mxu0 0
    %1920 = vmatprep.mubr.bf16.mxu0 0
    %1921 = vmatmul.mubr.bf16.gmra.mrb[0].mxu0 %v1267
    %v1922 = vpop.f32.mrb[0].mxu0
    %v1923 = vadd.f32 %v766, %v1922
    %v1924 = vpop.f32.mrb[0].mxu0
    %v1925 = vpop.f32.mrb[0].mxu0
    %v1926 = vadd.f32 %v766, %v1925
    %v1927 = vpop.f32.mrb[0].mxu0
    %1928 = vmatprep.mubr.bf16.mxu0 0
    %1929 = vmatmul.mubr.bf16.gmra.mrb[0].mxu0 %v1270
    %v1930 = vpop.f32.mrb[0].mxu0
    %v1931 = vadd.f32 %v766, %v1930
    %v1932 = vpop.f32.mrb[0].mxu0
    %v1933 = vpop.f32.mrb[0].mxu0
    %v1934 = vadd.f32 %v766, %v1933
    %v1935 = vpop.f32.mrb[0].mxu0
    %1936 = vmatprep.mubr.bf16.mxu0 0
    %1937 = vmatmul.mubr.bf16.gmra.mrb[0].mxu0 %v1273
    %v1938 = vpop.f32.mrb[0].mxu0
    %v1939 = vadd.f32 %v766, %v1938
    %v1940 = vpop.f32.mrb[0].mxu0
    %v1941 = vpop.f32.mrb[0].mxu0
    %v1942 = vadd.f32 %v766, %v1941
    %v1943 = vpop.f32.mrb[0].mxu0
    %1944 = vmatprep.mubr.bf16.mxu0 0
    %1945 = vmatmul.mubr.bf16.gmra.mrb[0].mxu0 %v1276
    %v1946 = vpop.f32.mrb[0].mxu0
    %v1947 = vadd.f32 %v766, %v1946
    %v1948 = vpop.f32.mrb[0].mxu0
    %v1949 = vpop.f32.mrb[0].mxu0
    %v1950 = vadd.f32 %v766, %v1949
    %v1951 = vpop.f32.mrb[0].mxu0
    %1952 = vdwg.mxu0
    %v1953 = vpack.c.bf16 %v1926, %v1923
    %v1954 = vpack.c.bf16 %v1934, %v1931
    %v1955 = vpack.c.bf16 %v1942, %v1939
    %v1956 = vpack.c.bf16 %v1950, %v1947
    %v1958 = vsel %vm347, %v1815, 0
    %v1961 = vsel %vm347, %v1816, 0
    %v1964 = vsel %vm347, %v1817, 0
    %v1967 = vsel %vm347, %v1818, 0
    %v1970 = vsel %vm347, %v1884, 0
    %v1973 = vsel %vm347, %v1885, 0
    %v1976 = vsel %vm347, %v1886, 0
    %v1979 = vsel %vm347, %v1887, 0
    %1981 = vmatprep.subr.bf16.mxu0 0
    %1982 = vmatpush1.bf16.xpose.msra.mxu0 %v1970
    %1983 = vmatprep.subr.bf16.mxu0 0
    %1984 = vmatpush1.bf16.xpose.msra.mxu0 %v1973
    %1985 = vmatprep.subr.bf16.mxu0 0
    %1986 = vmatpush1.bf16.xpose.msra.mxu0 %v1976
    %1987 = vmatprep.subr.bf16.mxu0 0
    %1988 = vmatpush1.bf16.xpose.msra.mxu0 %v1979
    %1989 = vmatprep.subr.bf16.mxu0 0
    %1990 = vmatpush1.bf16.xpose.msra.mxu0 0
    %1991 = vmatprep.subr.bf16.mxu0 0
    %1992 = vmatpush1.bf16.xpose.msra.mxu0 0
    %1993 = vmatprep.subr.bf16.mxu0 0
    %1994 = vmatpush1.bf16.xpose.msra.mxu0 0
    %1995 = vmatprep.subr.bf16.mxu0 0
    %1996 = vmatpush1.bf16.xpose.msra.mxu0 0
    %1997 = vmatprep.subr.bf16.mxu0 0
    %1998 = vmatpush1.bf16.xpose.msra.mxu0 0
    %1999 = vmatprep.subr.bf16.mxu0 0
    %2000 = vmatpush1.bf16.xpose.msra.mxu0 0
    %2001 = vmatprep.subr.bf16.mxu0 0
    %2002 = vmatpush1.bf16.xpose.msra.mxu0 0
    %2003 = vmatprep.subr.bf16.mxu0 0
    %2004 = vmatpush1.bf16.xpose.msra.mxu0 0
    %2005 = vmatprep.subr.bf16.mxu0 0
    %2006 = vmatpush1.bf16.xpose.msra.mxu0 0
    %2007 = vmatprep.subr.bf16.mxu0 0
    %2008 = vmatpush1.bf16.xpose.msra.mxu0 0
    %2009 = vmatprep.subr.bf16.mxu0 0
    %2010 = vmatpush1.bf16.xpose.msra.mxu0 0
    %2011 = vmatprep.subr.bf16.mxu0 0
    %2012 = vmatpush1.bf16.xpose.msra.mxu0 0
    %2013 = vmatprep.mubr.bf16.mxu0 0
    %2014 = vmatmul.mubr.bf16.gmra.mrb[0].mxu0 %v1958
    %v2015 = vpop.f32.mrb[0].mxu0
    %v2016 = vadd.f32 0.0, %v2015
    %v2017 = vpop.f32.mrb[0].mxu0
    %v2018 = vpop.f32.mrb[0].mxu0
    %v2019 = vadd.f32 0.0, %v2018
    %v2020 = vpop.f32.mrb[0].mxu0
    %2021 = vmatprep.mubr.bf16.mxu0 0
    %2022 = vmatmul.mubr.bf16.gmra.mrb[0].mxu0 %v1961
    %v2023 = vpop.f32.mrb[0].mxu0
    %v2024 = vadd.f32 0.0, %v2023
    %v2025 = vpop.f32.mrb[0].mxu0
    %v2026 = vpop.f32.mrb[0].mxu0
    %v2027 = vadd.f32 0.0, %v2026
    %v2028 = vpop.f32.mrb[0].mxu0
    %2029 = vmatprep.mubr.bf16.mxu0 0
    %2030 = vmatmul.mubr.bf16.gmra.mrb[0].mxu0 %v1964
    %v2031 = vpop.f32.mrb[0].mxu0
    %v2032 = vadd.f32 0.0, %v2031
    %v2033 = vpop.f32.mrb[0].mxu0
    %v2034 = vpop.f32.mrb[0].mxu0
    %v2035 = vadd.f32 0.0, %v2034
    %v2036 = vpop.f32.mrb[0].mxu0
    %2037 = vmatprep.mubr.bf16.mxu0 0
    %2038 = vmatmul.mubr.bf16.gmra.mrb[0].mxu0 %v1967
    %v2039 = vpop.f32.mrb[0].mxu0
    %v2040 = vadd.f32 0.0, %v2039
    %v2041 = vpop.f32.mrb[0].mxu0
    %v2042 = vpop.f32.mrb[0].mxu0
    %v2043 = vadd.f32 0.0, %v2042
    %v2044 = vpop.f32.mrb[0].mxu0
    %2045 = vdwg.mxu0
    %v2046 = vsel %vm437, %v2016, -inf
    %v2047 = vsel %vm437, %v2019, -inf
    %v2048 = vsel %vm437, %v2024, -inf
    %v2049 = vsel %vm437, %v2027, -inf
    %v2050 = vsel %vm437, %v2032, -inf
    %v2051 = vmax.f32 %v2046, %v2050
    %v2052 = vsel %vm437, %v2035, -inf
    %v2053 = vmax.f32 %v2047, %v2052
    %v2054 = vsel %vm437, %v2040, -inf
    %v2055 = vmax.f32 %v2048, %v2054
    %v2056 = vsel %vm437, %v2043, -inf
    %v2057 = vmax.f32 %v2049, %v2056
    %v2058 = vmax.f32 %v2051, %v2053
    %v2059 = vmax.f32 %v2055, %v2057
    %v2060 = vmax.f32 %v2058, %v2059
    %v2061 = vrot.slane %v2060, 4
    %v2062 = vmax.f32 %v2060, %v2061
    %v2063 = vrot.slane %v2062, 2
    %v2064 = vmax.f32 %v2062, %v2063
    %v2065 = vrot.slane %v2064, 1
    %v2066 = vmax.f32 %v2064, %v2065
    %v2067 = vsub.f32 %v2016, %v2066
    %v2068 = vsub.f32 %v2019, %v2066
    %v2069 = vsub.f32 %v2024, %v2066
    %v2070 = vsub.f32 %v2027, %v2066
    %v2071 = vsub.f32 %v2032, %v2066
    %v2072 = vsub.f32 %v2035, %v2066
    %v2073 = vsub.f32 %v2040, %v2066
    %v2074 = vsub.f32 %v2043, %v2066
    %v2075 = vmul.f32 %v2067, 1.442695
    %v2076 = vpow.pop %v2075
    %v2077 = vmul.f32 %v2068, 1.442695
    %v2078 = vpow.pop %v2077
    %v2079 = vmul.f32 %v2069, 1.442695
    %v2080 = vpow.pop %v2079
    %v2081 = vmul.f32 %v2070, 1.442695
    %v2082 = vpow.pop %v2081
    %v2083 = vmul.f32 %v2071, 1.442695
    %v2084 = vpow.pop %v2083
    %v2085 = vmul.f32 %v2072, 1.442695
    %v2086 = vpow.pop %v2085
    %v2087 = vmul.f32 %v2073, 1.442695
    %v2088 = vpow.pop %v2087
    %v2089 = vmul.f32 %v2074, 1.442695
    %v2090 = vpow.pop %v2089
    %v2091 = vsel %vm437, %v2076, 0.0
    %v2092 = vsel %vm437, %v2078, 0.0
    %v2093 = vadd.f32 %v2091, %v2092
    %v2094 = vsel %vm437, %v2080, 0.0
    %v2095 = vadd.f32 %v2093, %v2094
    %v2096 = vsel %vm437, %v2082, 0.0
    %v2097 = vadd.f32 %v2095, %v2096
    %v2098 = vsel %vm437, %v2084, 0.0
    %v2099 = vadd.f32 %v2097, %v2098
    %v2100 = vsel %vm437, %v2086, 0.0
    %v2101 = vadd.f32 %v2099, %v2100
    %v2102 = vsel %vm437, %v2088, 0.0
    %v2103 = vadd.f32 %v2101, %v2102
    %v2104 = vsel %vm437, %v2090, 0.0
    %v2105 = vadd.f32 %v2103, %v2104
    %v2106 = vrot.slane %v2105, 4
    %v2107 = vadd.f32 %v2105, %v2106
    %v2108 = vrot.slane %v2107, 2
    %v2109 = vadd.f32 %v2107, %v2108
    %v2110 = vrot.slane %v2109, 1
    %v2111 = vadd.f32 %v2109, %v2110
    %v2112 = vrcp.pop %v2111
    %v2113 = vmul.f32 %v2076, %v2112
    %v2114 = vmul.f32 %v2078, %v2112
    %v2115 = vmul.f32 %v2080, %v2112
    %v2116 = vmul.f32 %v2082, %v2112
    %v2117 = vmul.f32 %v2084, %v2112
    %v2118 = vmul.f32 %v2086, %v2112
    %v2119 = vmul.f32 %v2088, %v2112
    %v2120 = vmul.f32 %v2090, %v2112
    %v2121 = vpack.c.bf16 %v2114, %v2113
    %v2122 = vpack.c.bf16 %v2116, %v2115
    %v2123 = vpack.c.bf16 %v2118, %v2117
    %v2124 = vpack.c.bf16 %v2120, %v2119
    %v2126 = vsel %vm437, %v2121, 0
    %v2129 = vsel %vm437, %v2122, 0
    %v2132 = vsel %vm437, %v2123, 0
    %v2135 = vsel %vm437, %v2124, 0
    %2137 = vmatprep.subr.bf16.mxu0 0
    %2138 = vmatpush1.bf16.msra.mxu0 %v1953
    %2139 = vmatprep.subr.bf16.mxu0 0
    %2140 = vmatpush1.bf16.msra.mxu0 %v1954
    %2141 = vmatprep.subr.bf16.mxu0 0
    %2142 = vmatpush1.bf16.msra.mxu0 %v1955
    %2143 = vmatprep.subr.bf16.mxu0 0
    %2144 = vmatpush1.bf16.msra.mxu0 %v1956
    %2145 = vmatprep.subr.bf16.mxu0 0
    %2146 = vmatpush1.bf16.msra.mxu0 0
    %2147 = vmatprep.subr.bf16.mxu0 0
    %2148 = vmatpush1.bf16.msra.mxu0 0
    %2149 = vmatprep.subr.bf16.mxu0 0
    %2150 = vmatpush1.bf16.msra.mxu0 0
    %2151 = vmatprep.subr.bf16.mxu0 0
    %2152 = vmatpush1.bf16.msra.mxu0 0
    %2153 = vmatprep.subr.bf16.mxu0 0
    %2154 = vmatpush1.bf16.msra.mxu0 0
    %2155 = vmatprep.subr.bf16.mxu0 0
    %2156 = vmatpush1.bf16.msra.mxu0 0
    %2157 = vmatprep.subr.bf16.mxu0 0
    %2158 = vmatpush1.bf16.msra.mxu0 0
    %2159 = vmatprep.subr.bf16.mxu0 0
    %2160 = vmatpush1.bf16.msra.mxu0 0
    %2161 = vmatprep.subr.bf16.mxu0 0
    %2162 = vmatpush1.bf16.msra.mxu0 0
    %2163 = vmatprep.subr.bf16.mxu0 0
    %2164 = vmatpush1.bf16.msra.mxu0 0
    %2165 = vmatprep.subr.bf16.mxu0 0
    %2166 = vmatpush1.bf16.msra.mxu0 0
    %2167 = vmatprep.subr.bf16.mxu0 0
    %2168 = vmatpush1.bf16.msra.mxu0 0
    %2169 = vmatprep.mubr.bf16.mxu0 0
    %2170 = vmatmul.mubr.bf16.gmra.mrb[0].mxu0 %v2126
    %v2171 = vpop.f32.mrb[0].mxu0
    %v2172 = vadd.f32 0.0, %v2171
    %v2173 = vpop.f32.mrb[0].mxu0
    %v2174 = vpop.f32.mrb[0].mxu0
    %v2175 = vadd.f32 0.0, %v2174
    %v2176 = vpop.f32.mrb[0].mxu0
    %2177 = vmatprep.mubr.bf16.mxu0 0
    %2178 = vmatmul.mubr.bf16.gmra.mrb[0].mxu0 %v2129
    %v2179 = vpop.f32.mrb[0].mxu0
    %v2180 = vadd.f32 0.0, %v2179
    %v2181 = vpop.f32.mrb[0].mxu0
    %v2182 = vpop.f32.mrb[0].mxu0
    %v2183 = vadd.f32 0.0, %v2182
    %v2184 = vpop.f32.mrb[0].mxu0
    %2185 = vmatprep.mubr.bf16.mxu0 0
    %2186 = vmatmul.mubr.bf16.gmra.mrb[0].mxu0 %v2132
    %v2187 = vpop.f32.mrb[0].mxu0
    %v2188 = vadd.f32 0.0, %v2187
    %v2189 = vpop.f32.mrb[0].mxu0
    %v2190 = vpop.f32.mrb[0].mxu0
    %v2191 = vadd.f32 0.0, %v2190
    %v2192 = vpop.f32.mrb[0].mxu0
    %2193 = vmatprep.mubr.bf16.mxu0 0
    %2194 = vmatmul.mubr.bf16.gmra.mrb[0].mxu0 %v2135
    %v2195 = vpop.f32.mrb[0].mxu0
    %v2196 = vadd.f32 0.0, %v2195
    %v2197 = vpop.f32.mrb[0].mxu0
    %v2198 = vpop.f32.mrb[0].mxu0
    %v2199 = vadd.f32 0.0, %v2198
    %v2200 = vpop.f32.mrb[0].mxu0
    %2201 = vdwg.mxu0
    %v2202 = vpack.c.bf16 %v2175, %v2172
    %v2203 = vpack.c.bf16 %v2183, %v2180
    %v2204 = vpack.c.bf16 %v2191, %v2188
    %v2205 = vpack.c.bf16 %v2199, %v2196
    %v2207 = vsel %vm347, %v2202, 0
    %v2210 = vsel %vm347, %v2203, 0
    %v2213 = vsel %vm347, %v2204, 0
    %v2216 = vsel %vm347, %v2205, 0
    %2218 = vmatprep.subr.bf16.mxu0 0
    %2219 = vmatpush1.bf16.xpose.msra.mxu0 %v2207
    %2220 = vmatprep.subr.bf16.mxu0 0
    %2221 = vmatpush1.bf16.xpose.msra.mxu0 %v2210
    %2222 = vmatprep.subr.bf16.mxu0 0
    %2223 = vmatpush1.bf16.xpose.msra.mxu0 %v2213
    %2224 = vmatprep.subr.bf16.mxu0 0
    %2225 = vmatpush1.bf16.xpose.msra.mxu0 %v2216
    %2226 = vmatprep.subr.bf16.mxu0 0
    %2227 = vmatpush1.bf16.xpose.msra.mxu0 0
    %2228 = vmatprep.subr.bf16.mxu0 0
    %2229 = vmatpush1.bf16.xpose.msra.mxu0 0
    %2230 = vmatprep.subr.bf16.mxu0 0
    %2231 = vmatpush1.bf16.xpose.msra.mxu0 0
    %2232 = vmatprep.subr.bf16.mxu0 0
    %2233 = vmatpush1.bf16.xpose.msra.mxu0 0
    %2234 = vmatprep.subr.bf16.mxu0 0
    %2235 = vmatpush1.bf16.xpose.msra.mxu0 0
    %2236 = vmatprep.subr.bf16.mxu0 0
    %2237 = vmatpush1.bf16.xpose.msra.mxu0 0
    %2238 = vmatprep.subr.bf16.mxu0 0
    %2239 = vmatpush1.bf16.xpose.msra.mxu0 0
    %2240 = vmatprep.subr.bf16.mxu0 0
    %2241 = vmatpush1.bf16.xpose.msra.mxu0 0
    %2242 = vmatprep.subr.bf16.mxu0 0
    %2243 = vmatpush1.bf16.xpose.msra.mxu0 0
    %2244 = vmatprep.subr.bf16.mxu0 0
    %2245 = vmatpush1.bf16.xpose.msra.mxu0 0
    %2246 = vmatprep.subr.bf16.mxu0 0
    %2247 = vmatpush1.bf16.xpose.msra.mxu0 0
    %2248 = vmatprep.subr.bf16.mxu0 0
    %2249 = vmatpush1.bf16.xpose.msra.mxu0 0
    %2250 = vmatprep.mubr.bf16.mxu0 0
    %2251 = vmatmul.mubr.bf16.gmra.mrb[0].mxu0 %v1095
    %v2252 = vpop.f32.mrb[0].mxu0
    %v2253 = vadd.f32 0.0, %v2252
    %v2254 = vpop.f32.mrb[0].mxu0
    %v2255 = vpop.f32.mrb[0].mxu0
    %v2256 = vadd.f32 0.0, %v2255
    %v2257 = vpop.f32.mrb[0].mxu0
    %2258 = vdwg.mxu0
    %v2260 = vsel %vm347, %v1738, 0
    %v2263 = vsel %vm347, %v1739, 0
    %v2266 = vsel %vm347, %v1740, 0
    %v2269 = vsel %vm347, %v1741, 0
    %2271 = vmatprep.subr.bf16.mxu0 0
    %2272 = vmatpush1.bf16.xpose.msra.mxu0 %v2260
    %2273 = vmatprep.subr.bf16.mxu0 0
    %2274 = vmatpush1.bf16.xpose.msra.mxu0 %v2263
    %2275 = vmatprep.subr.bf16.mxu0 0
    %2276 = vmatpush1.bf16.xpose.msra.mxu0 %v2266
    %2277 = vmatprep.subr.bf16.mxu0 0
    %2278 = vmatpush1.bf16.xpose.msra.mxu0 %v2269
    %2279 = vmatprep.subr.bf16.mxu0 0
    %2280 = vmatpush1.bf16.xpose.msra.mxu0 0
    %2281 = vmatprep.subr.bf16.mxu0 0
    %2282 = vmatpush1.bf16.xpose.msra.mxu0 0
    %2283 = vmatprep.subr.bf16.mxu0 0
    %2284 = vmatpush1.bf16.xpose.msra.mxu0 0
    %2285 = vmatprep.subr.bf16.mxu0 0
    %2286 = vmatpush1.bf16.xpose.msra.mxu0 0
    %2287 = vmatprep.subr.bf16.mxu0 0
    %2288 = vmatpush1.bf16.xpose.msra.mxu0 0
    %2289 = vmatprep.subr.bf16.mxu0 0
    %2290 = vmatpush1.bf16.xpose.msra.mxu0 0
    %2291 = vmatprep.subr.bf16.mxu0 0
    %2292 = vmatpush1.bf16.xpose.msra.mxu0 0
    %2293 = vmatprep.subr.bf16.mxu0 0
    %2294 = vmatpush1.bf16.xpose.msra.mxu0 0
    %2295 = vmatprep.subr.bf16.mxu0 0
    %2296 = vmatpush1.bf16.xpose.msra.mxu0 0
    %2297 = vmatprep.subr.bf16.mxu0 0
    %2298 = vmatpush1.bf16.xpose.msra.mxu0 0
    %2299 = vmatprep.subr.bf16.mxu0 0
    %2300 = vmatpush1.bf16.xpose.msra.mxu0 0
    %2301 = vmatprep.subr.bf16.mxu0 0
    %2302 = vmatpush1.bf16.xpose.msra.mxu0 0
    %2303 = vmatprep.mubr.bf16.mxu0 0
    %2304 = vmatmul.mubr.bf16.gmra.mrb[0].mxu0 %v1156
    %v2305 = vpop.f32.mrb[0].mxu0
    %v2306 = vadd.f32 %v2253, %v2305
    %v2307 = vpop.f32.mrb[0].mxu0
    %v2308 = vpop.f32.mrb[0].mxu0
    %v2309 = vadd.f32 %v2256, %v2308
    %v2310 = vpop.f32.mrb[0].mxu0
    %2311 = vdwg.mxu0
    %v2312 = vadd.f32 %v2306, %v1214
    %v2313 = vadd.f32 %v2309, %v1219
    %v2314 = vadd.f32 %v2312, %v1228
    %v2315 = vadd.f32 %v2313, %v1229
    %s2316 = scalar_lea.vmem [#allocation5], 16
    %2317 = vst.msk [vmem:[%s2316] sm:$0xff] %vm437, %v2314
    %2318 = vst.msk [vmem:[%s2316 + $0x8] sm:$0xff] %vm437, %v2315
    // Predicated region
    $region26: #{tpu_custom_call.1} parent=1 // pred_check
      _
    $region27: #{tpu_custom_call.1} parent=1 // pred_check_branch
      %2320 = sbr.rel (0) target = $region29
    $region28: #{tpu_custom_call.1} parent=1 // pred_region
      %s2322 = ssub.s32 512, 512
      %2323 = vsyncadd [#allocation4], %s2322
      %s2324 = sshll.u32 [#allocation5], 4
      %s2325 = int_to_ptr.vmem [resolvable:$true] %s2324
      %2330 = dma.vmem_to_hbm [thread:$0]  %s2325, 512, %s5, [#allocation4], 128, 128, 8
    $region29: #{tpu_custom_call.1} parent=1 // pred_fallthru
      _
    // Predicated region
    $region30: #{tpu_custom_call.1} parent=1 // pred_check
      _
    $region31: #{tpu_custom_call.1} parent=1 // pred_check_branch
      %2332 = sbr.rel (0) target = $region33
    $region32: #{tpu_custom_call.1} parent=1 // pred_region
      %2333 = dma.done [#allocation4], 512
    $region33: #{tpu_custom_call.1} parent=1 // pred_fallthru
      _
    %2334 = vsyncpa [#allocation3], 1
    %2335 = vsyncpa [#allocation4], 1

</llo_original>
